<compile_context>
chip_gen: v7x
topology: tpu7x:2x2x1
jax: 0.10.0
libtpu: 0.0.40
codegen_flags: <defaults>
</compile_context>

<pallas_src>
import functools

import jax
import jax.numpy as jnp
import numpy as np
from jax.experimental import pallas as pl
from jax.experimental.pallas import tpu as pltpu


def _transform_kernel(x_ref, w_ref, b_ref, g_ref, e_ref, r_ref, o_ref, *, k, dim_in):
    # x_ref : (bn, k*dim_in)   lane-dense region features (native dtype)
    # w_ref : (kd, kk)         block-diagonal grouped-conv weight (input dtype)
    # b_ref : (1, kk)          grouped-conv bias (f32)
    # g_ref : (kk, kk)         0/1 group-sum-and-expand matrix (f32)
    # e_ref : (k, kk, kd)      0/1 multiplier lane-expansion matrices (input dtype)
    # r_ref : (kd, dim_in)     0/1 lane-block reduction matrix (input dtype)
    # o_ref : (bn, k*dim_in)
    x = x_ref[...]                                       # native dtype (bf16 stays bf16)

    # Grouped Conv1d == ONE MXU contraction with the block-diagonal weight.
    conv = jnp.dot(x, w_ref[...], preferred_element_type=jnp.float32) + b_ref[...]

    # ONE global row-max + ONE exp over all k*k logits (EUP / XLU, hoisted out of
    # the group loop). Safe: softmax is shift-invariant per group, global max >=
    # group max so the exponent never overflows.
    m = jnp.max(conv, axis=-1, keepdims=True)            # (bn, 1)
    e = jnp.exp(conv - m)                                # (bn, kk) f32

    # Per-group denominators, summed AND replicated back to each group's kk lanes
    # by the idle MXU:  den[:, i*k+j] = sum_j' e[:, i*k+j'].
    den = jnp.dot(e, g_ref[...], preferred_element_type=jnp.float32)
    p = e * pl.reciprocal(den, approx=True)              # softmax, (bn, kk) f32
    pc = p.astype(x.dtype)

    # out[:, i, :] = sum_j p[:, i, j] * x[:, j, :], one output group at a time:
    #   W_i  = pc @ E_i : lane-expand row-i multipliers to (bn, kd)      [MXU]
    #   t    = W_i * x  : full-128-lane FMA in the input dtype           [VPU]
    #   out_i = t @ R   : sum the k lane blocks -> (bn, dim_in), f32 acc [MXU]
    # Each group's result is stored immediately (no deferred concatenate), so only
    # one (bn, kd)-sized working value is live at any time.
    for i in range(k):
        w_i = jnp.dot(pc, e_ref[i])                      # (bn, kd), input dtype
        t = w_i * x                                      # (bn, kd), input dtype
        out_i = jnp.dot(t, r_ref[...], preferred_element_type=jnp.float32)
        o_ref[:, i * dim_in:(i + 1) * dim_in] = out_i.astype(o_ref.dtype)


def _sublane_multiple(dtype):
    # Min sublane multiple for a multi-step grid: 8 for 32-bit, 16 bf16, 32 int8/fp8.
    return max(8, 32 // np.dtype(dtype).itemsize)


def transform_pallas(region_feats, conv_weight, conv_bias, *, block_n=1024,
                     vmem_budget_bytes=48 * 1024 * 1024):
    """region_feats: (N, k, dim_in); conv_weight: (k*k, 1, dim_in); conv_bias: (k*k,)."""
    N, k, dim_in = region_feats.shape
    kk, kd = k * k, k * dim_in
    assert conv_weight.shape == (kk, 1, dim_in)
    assert conv_bias.shape == (kk,)
    dtype = region_feats.dtype
    itemsize = np.dtype(dtype).itemsize

    # ---- constant operands (per-layer precomputable glue; small for typical k) ----
    # Block-diagonal grouped-conv weight:
    #   w_bd[g*dim_in + d, h*k + j] = weight[g*k + j, 0, d] * (g == h)
    w = conv_weight.reshape(k, k, dim_in)
    w_bd = jnp.einsum("gjd,gh->gdhj", w, jnp.eye(k, dtype=w.dtype)).reshape(kd, kk)
    w_bd = w_bd.astype(dtype)                       # keep the big matmul in input dtype
    bias = conv_bias.reshape(1, kk).astype(jnp.float32)   # added to an f32 MXU result

    grp = np.repeat(np.arange(k), k)                # group id of each logit column
    g_kk = jnp.asarray((grp[:, None] == grp[None, :]).astype(np.float32))  # (kk, kk)

    e_np = np.zeros((k, kk, kd), dtype=np.float32)  # E[i, i*k+j, j*dim_in+d] = 1
    for i in range(k):
        for j in range(k):
            e_np[i, i * k + j, j * dim_in:(j + 1) * dim_in] = 1.0
    e_all = jnp.asarray(e_np).astype(dtype)

    r_np = np.zeros((kd, dim_in), dtype=np.float32)  # R[j*dim_in+d, d] = 1
    for j in range(k):
        r_np[j * dim_in:(j + 1) * dim_in, :] = np.eye(dim_in, dtype=np.float32)
    r_mat = jnp.asarray(r_np).astype(dtype)

    # ---- lane-dense layout + generation-aware N tiling ----
    x_flat = region_feats.reshape(N, kd)
    sub = _sublane_multiple(dtype)

    def rup(a, m):
        return ((a + m - 1) // m) * m

    # >= 2 grid steps whenever N allows it, so both v7x TensorCores get work.
    bn = min(block_n, rup(pl.cdiv(N, 2), sub))
    bn = max(sub, (bn // sub) * sub)

    # Shrink bn until double-buffered I/O + resident constants + f32 intermediates
    # fit the VMEM budget (v7x has only 64 MiB physical VMEM per TC).
    const_bytes = (w_bd.size + e_all.size + r_mat.size) * itemsize \
        + (bias.size + g_kk.size) * 4

    def footprint(bn_):
        io = 2 * 2 * bn_ * kd * itemsize             # in + out blocks, double-buffered
        tmp = bn_ * (3 * kd + 4 * kk) * 4            # e/p/den + per-group working set
        return io + tmp + const_bytes

    while bn > sub and footprint(bn) > vmem_budget_bytes:
        bn = max(sub, ((bn // 2) // sub) * sub)

    n_pad = pl.cdiv(N, bn) * bn
    if n_pad != N:
        x_flat = jnp.pad(x_flat, ((0, n_pad - N), (0, 0)))
    grid = (n_pad // bn,)

    vmem_limit = int(min(64 * 1024 * 1024, max(32 * 1024 * 1024, 2 * footprint(bn))))

    kernel = functools.partial(_transform_kernel, k=k, dim_in=dim_in)
    out_flat = pl.pallas_call(
        kernel,
        out_shape=jax.ShapeDtypeStruct((n_pad, kd), dtype),
        grid_spec=pltpu.PrefetchScalarGridSpec(
            num_scalar_prefetch=0,
            grid=grid,
            in_specs=[
                pl.BlockSpec((bn, kd), lambda i: (i, 0)),
                pl.BlockSpec((kd, kk), lambda i: (0, 0)),
                pl.BlockSpec((1, kk), lambda i: (0, 0)),
                pl.BlockSpec((kk, kk), lambda i: (0, 0)),
                pl.BlockSpec((k, kk, kd), lambda i: (0, 0, 0)),
                pl.BlockSpec((kd, dim_in), lambda i: (0, 0)),
            ],
            out_specs=pl.BlockSpec((bn, kd), lambda i: (i, 0)),
        ),
        compiler_params=pltpu.CompilerParams(
            dimension_semantics=("parallel",),
            vmem_limit_bytes=vmem_limit,
        ),
    )(x_flat, w_bd, bias, g_kk, e_all, r_mat)

    return out_flat[:N].reshape(N, k, dim_in)


def transform_ref(region_feats, conv_weight, conv_bias):
    """Pure-JAX reference mirroring the PyTorch Transform.forward."""
    N, k, dim_in = region_feats.shape
    w = conv_weight.reshape(k, k, dim_in)
    b = conv_bias.reshape(k, k)
    conv = jnp.einsum("ngd,gjd->ngj", region_feats, w) + b[None]
    mult = jax.nn.softmax(conv, axis=-1)
    return jnp.einsum("nij,njd->nid", mult, region_feats)


if __name__ == "__main__":
    # Shapes consistent with DHGLayer's VertexConv: N nodes, k structured neighbours.
    N, k, dim_in = 20, 8, 32

    key = jax.random.PRNGKey(0)
    kx, kw, kb = jax.random.split(key, 3)

    region_feats = jax.random.normal(kx, (N, k, dim_in), dtype=jnp.float32)

    # Deterministic Conv1d-style init: U(-bound, bound), bound = 1/sqrt(fan_in),
    # fan_in = (in_channels/groups) * kernel_size = dim_in.
    bound = 1.0 / np.sqrt(dim_in)
    conv_weight = jax.random.uniform(
        kw, (k * k, 1, dim_in), dtype=jnp.float32, minval=-bound, maxval=bound
    )
    conv_bias = jax.random.uniform(
        kb, (k * k,), dtype=jnp.float32, minval=-bound, maxval=bound
    )

    ref = jax.block_until_ready(transform_ref(region_feats, conv_weight, conv_bias))

    # Default path: f32, auto-sized tile (>= 2 grid steps, padded ragged tail).
    out = jax.block_until_ready(
        transform_pallas(region_feats, conv_weight, conv_bias)
    )
    np.testing.assert_allclose(np.asarray(out), np.asarray(ref), rtol=1e-2, atol=1e-2)

    # Small-block path (bn=8 -> 3 grid steps, padded tail block).
    out_small = jax.block_until_ready(
        transform_pallas(region_feats, conv_weight, conv_bias, block_n=8)
    )
    np.testing.assert_allclose(np.asarray(out_small), np.asarray(ref), rtol=1e-2, atol=1e-2)

    # bf16 path: exercises dtype-aware sublane rounding and the bf16 MXU path.
    rf_bf16 = region_feats.astype(jnp.bfloat16)
    out_bf16 = jax.block_until_ready(
        transform_pallas(rf_bf16, conv_weight, conv_bias)
    )
    ref_bf16 = transform_ref(
        rf_bf16.astype(jnp.float32),
        conv_weight.astype(jnp.bfloat16).astype(jnp.float32),
        conv_bias,
    )
    np.testing.assert_allclose(
        np.asarray(out_bf16.astype(jnp.float32)), np.asarray(ref_bf16),
        rtol=6e-2, atol=6e-2,
    )

    print("KERNEL_OK")
</pallas_src>

<mosaic_0001>
module attributes {stable_mosaic.version = 11 : i64} {
  func.func @_transform_kernel(%arg0: i32, %arg1: memref<16x256xf32, #tpu.memory_space<vmem>>, %arg2: memref<256x64xf32, #tpu.memory_space<vmem>>, %arg3: memref<1x64xf32, #tpu.memory_space<vmem>>, %arg4: memref<64x64xf32, #tpu.memory_space<vmem>>, %arg5: memref<8x64x256xf32, #tpu.memory_space<vmem>>, %arg6: memref<256x32xf32, #tpu.memory_space<vmem>>, %arg7: memref<16x256xf32, #tpu.memory_space<vmem>>) attributes {dimension_semantics = [#tpu.dimension_semantics<parallel>], iteration_bounds = array<i64: 2>, scalar_prefetch = 0 : i64, scratch_operands = 0 : i64, tpu.core_type = #tpu.core_type<tc>, window_params = [{transform_indices = @transform_0, window_bounds = array<i64: 16, 256>}, {pipeline_mode = #tpu.pipeline_mode<synchronous>, transform_indices = @transform_1, window_bounds = array<i64: 256, 64>}, {pipeline_mode = #tpu.pipeline_mode<synchronous>, transform_indices = @transform_2, window_bounds = array<i64: 1, 64>}, {pipeline_mode = #tpu.pipeline_mode<synchronous>, transform_indices = @transform_3, window_bounds = array<i64: 64, 64>}, {pipeline_mode = #tpu.pipeline_mode<synchronous>, transform_indices = @transform_4, window_bounds = array<i64: 8, 64, 256>}, {pipeline_mode = #tpu.pipeline_mode<synchronous>, transform_indices = @transform_5, window_bounds = array<i64: 256, 32>}, {transform_indices = @transform_6, window_bounds = array<i64: 16, 256>}]} {
    %c0 = arith.constant 0 : index
    %c0_0 = arith.constant 0 : index
    %0 = vector.load %arg1[%c0, %c0_0] : memref<16x256xf32, #tpu.memory_space<vmem>>, vector<16x256xf32>
    %c0_1 = arith.constant 0 : index
    %c0_2 = arith.constant 0 : index
    %1 = vector.load %arg2[%c0_1, %c0_2] : memref<256x64xf32, #tpu.memory_space<vmem>>, vector<256x64xf32>
    %cst = arith.constant dense<0.000000e+00> : vector<16x64xf32>
    %2 = tpu.matmul %0, %1, %cst {dimension_numbers = #tpu.dot_dimension_numbers<[1], [0], [0], [1], [0, 0, 1, 1], [], []>} : vector<16x256xf32>, vector<256x64xf32>, vector<16x64xf32> -> vector<16x64xf32>
    %c0_3 = arith.constant 0 : index
    %c0_4 = arith.constant 0 : index
    %3 = vector.load %arg3[%c0_3, %c0_4] : memref<1x64xf32, #tpu.memory_space<vmem>>, vector<1x64xf32>
    %4 = vector.broadcast %3 : vector<1x64xf32> to vector<16x64xf32>
    %5 = arith.addf %2, %4 : vector<16x64xf32>
    %cst_5 = arith.constant dense<0xFF800000> : vector<16xf32>
    %6 = vector.multi_reduction <maximumf>, %5, %cst_5 [1] : vector<16x64xf32> to vector<16xf32>
    %7 = vector.shape_cast %6 : vector<16xf32> to vector<16x1xf32>
    %8 = vector.broadcast %7 : vector<16x1xf32> to vector<16x64xf32>
    %9 = arith.subf %5, %8 : vector<16x64xf32>
    %10 = math.exp %9 : vector<16x64xf32>
    %c0_6 = arith.constant 0 : index
    %c0_7 = arith.constant 0 : index
    %11 = vector.load %arg4[%c0_6, %c0_7] : memref<64x64xf32, #tpu.memory_space<vmem>>, vector<64x64xf32>
    %cst_8 = arith.constant dense<0.000000e+00> : vector<16x64xf32>
    %12 = tpu.matmul %10, %11, %cst_8 {dimension_numbers = #tpu.dot_dimension_numbers<[1], [0], [0], [1], [0, 0, 1, 1], [], []>} : vector<16x64xf32>, vector<64x64xf32>, vector<16x64xf32> -> vector<16x64xf32>
    %13 = tpu.reciprocal %12 {approx = true} : vector<16x64xf32> -> vector<16x64xf32>
    %14 = arith.mulf %10, %13 : vector<16x64xf32>
    %c0_9 = arith.constant 0 : index
    %c0_10 = arith.constant 0 : index
    %c0_11 = arith.constant 0 : index
    %15 = vector.load %arg5[%c0_9, %c0_10, %c0_11] : memref<8x64x256xf32, #tpu.memory_space<vmem>>, vector<1x64x256xf32>
    %16 = vector.shape_cast %15 : vector<1x64x256xf32> to vector<64x256xf32>
    %cst_12 = arith.constant dense<0.000000e+00> : vector<16x256xf32>
    %17 = tpu.matmul %14, %16, %cst_12 {dimension_numbers = #tpu.dot_dimension_numbers<[1], [0], [0], [1], [0, 0, 1, 1], [], []>} : vector<16x64xf32>, vector<64x256xf32>, vector<16x256xf32> -> vector<16x256xf32>
    %18 = arith.mulf %17, %0 : vector<16x256xf32>
    %c0_13 = arith.constant 0 : index
    %c0_14 = arith.constant 0 : index
    %19 = vector.load %arg6[%c0_13, %c0_14] : memref<256x32xf32, #tpu.memory_space<vmem>>, vector<256x32xf32>
    %cst_15 = arith.constant dense<0.000000e+00> : vector<16x32xf32>
    %20 = tpu.matmul %18, %19, %cst_15 {dimension_numbers = #tpu.dot_dimension_numbers<[1], [0], [0], [1], [0, 0, 1, 1], [], []>} : vector<16x256xf32>, vector<256x32xf32>, vector<16x32xf32> -> vector<16x32xf32>
    %c0_16 = arith.constant 0 : index
    %c0_17 = arith.constant 0 : index
    %21 = vector.load %arg7[%c0_16, %c0_17] : memref<16x256xf32, #tpu.memory_space<vmem>>, vector<16x32xf32>
    tpu.vector_store %arg7[%c0_16, %c0_17], %20 {strides = array<i32>} : memref<16x256xf32, #tpu.memory_space<vmem>>, vector<16x32xf32>,
    %c1 = arith.constant 1 : index
    %c0_18 = arith.constant 0 : index
    %c0_19 = arith.constant 0 : index
    %22 = vector.load %arg5[%c1, %c0_18, %c0_19] : memref<8x64x256xf32, #tpu.memory_space<vmem>>, vector<1x64x256xf32>
    %23 = vector.shape_cast %22 : vector<1x64x256xf32> to vector<64x256xf32>
    %cst_20 = arith.constant dense<0.000000e+00> : vector<16x256xf32>
    %24 = tpu.matmul %14, %23, %cst_20 {dimension_numbers = #tpu.dot_dimension_numbers<[1], [0], [0], [1], [0, 0, 1, 1], [], []>} : vector<16x64xf32>, vector<64x256xf32>, vector<16x256xf32> -> vector<16x256xf32>
    %25 = arith.mulf %24, %0 : vector<16x256xf32>
    %c0_21 = arith.constant 0 : index
    %c0_22 = arith.constant 0 : index
    %26 = vector.load %arg6[%c0_21, %c0_22] : memref<256x32xf32, #tpu.memory_space<vmem>>, vector<256x32xf32>
    %cst_23 = arith.constant dense<0.000000e+00> : vector<16x32xf32>
    %27 = tpu.matmul %25, %26, %cst_23 {dimension_numbers = #tpu.dot_dimension_numbers<[1], [0], [0], [1], [0, 0, 1, 1], [], []>} : vector<16x256xf32>, vector<256x32xf32>, vector<16x32xf32> -> vector<16x32xf32>
    %c0_24 = arith.constant 0 : index
    %c32 = arith.constant 32 : index
    %28 = vector.load %arg7[%c0_24, %c32] : memref<16x256xf32, #tpu.memory_space<vmem>>, vector<16x32xf32>
    tpu.vector_store %arg7[%c0_24, %c32], %27 {strides = array<i32>} : memref<16x256xf32, #tpu.memory_space<vmem>>, vector<16x32xf32>,
    %c2 = arith.constant 2 : index
    %c0_25 = arith.constant 0 : index
    %c0_26 = arith.constant 0 : index
    %29 = vector.load %arg5[%c2, %c0_25, %c0_26] : memref<8x64x256xf32, #tpu.memory_space<vmem>>, vector<1x64x256xf32>
    %30 = vector.shape_cast %29 : vector<1x64x256xf32> to vector<64x256xf32>
    %cst_27 = arith.constant dense<0.000000e+00> : vector<16x256xf32>
    %31 = tpu.matmul %14, %30, %cst_27 {dimension_numbers = #tpu.dot_dimension_numbers<[1], [0], [0], [1], [0, 0, 1, 1], [], []>} : vector<16x64xf32>, vector<64x256xf32>, vector<16x256xf32> -> vector<16x256xf32>
    %32 = arith.mulf %31, %0 : vector<16x256xf32>
    %c0_28 = arith.constant 0 : index
    %c0_29 = arith.constant 0 : index
    %33 = vector.load %arg6[%c0_28, %c0_29] : memref<256x32xf32, #tpu.memory_space<vmem>>, vector<256x32xf32>
    %cst_30 = arith.constant dense<0.000000e+00> : vector<16x32xf32>
    %34 = tpu.matmul %32, %33, %cst_30 {dimension_numbers = #tpu.dot_dimension_numbers<[1], [0], [0], [1], [0, 0, 1, 1], [], []>} : vector<16x256xf32>, vector<256x32xf32>, vector<16x32xf32> -> vector<16x32xf32>
    %c0_31 = arith.constant 0 : index
    %c64 = arith.constant 64 : index
    %35 = vector.load %arg7[%c0_31, %c64] : memref<16x256xf32, #tpu.memory_space<vmem>>, vector<16x32xf32>
    tpu.vector_store %arg7[%c0_31, %c64], %34 {strides = array<i32>} : memref<16x256xf32, #tpu.memory_space<vmem>>, vector<16x32xf32>,
    %c3 = arith.constant 3 : index
    %c0_32 = arith.constant 0 : index
    %c0_33 = arith.constant 0 : index
    %36 = vector.load %arg5[%c3, %c0_32, %c0_33] : memref<8x64x256xf32, #tpu.memory_space<vmem>>, vector<1x64x256xf32>
    %37 = vector.shape_cast %36 : vector<1x64x256xf32> to vector<64x256xf32>
    %cst_34 = arith.constant dense<0.000000e+00> : vector<16x256xf32>
    %38 = tpu.matmul %14, %37, %cst_34 {dimension_numbers = #tpu.dot_dimension_numbers<[1], [0], [0], [1], [0, 0, 1, 1], [], []>} : vector<16x64xf32>, vector<64x256xf32>, vector<16x256xf32> -> vector<16x256xf32>
    %39 = arith.mulf %38, %0 : vector<16x256xf32>
    %c0_35 = arith.constant 0 : index
    %c0_36 = arith.constant 0 : index
    %40 = vector.load %arg6[%c0_35, %c0_36] : memref<256x32xf32, #tpu.memory_space<vmem>>, vector<256x32xf32>
    %cst_37 = arith.constant dense<0.000000e+00> : vector<16x32xf32>
    %41 = tpu.matmul %39, %40, %cst_37 {dimension_numbers = #tpu.dot_dimension_numbers<[1], [0], [0], [1], [0, 0, 1, 1], [], []>} : vector<16x256xf32>, vector<256x32xf32>, vector<16x32xf32> -> vector<16x32xf32>
    %c0_38 = arith.constant 0 : index
    %c96 = arith.constant 96 : index
    %42 = vector.load %arg7[%c0_38, %c96] : memref<16x256xf32, #tpu.memory_space<vmem>>, vector<16x32xf32>
    tpu.vector_store %arg7[%c0_38, %c96], %41 {strides = array<i32>} : memref<16x256xf32, #tpu.memory_space<vmem>>, vector<16x32xf32>,
    %c4 = arith.constant 4 : index
    %c0_39 = arith.constant 0 : index
    %c0_40 = arith.constant 0 : index
    %43 = vector.load %arg5[%c4, %c0_39, %c0_40] : memref<8x64x256xf32, #tpu.memory_space<vmem>>, vector<1x64x256xf32>
    %44 = vector.shape_cast %43 : vector<1x64x256xf32> to vector<64x256xf32>
    %cst_41 = arith.constant dense<0.000000e+00> : vector<16x256xf32>
    %45 = tpu.matmul %14, %44, %cst_41 {dimension_numbers = #tpu.dot_dimension_numbers<[1], [0], [0], [1], [0, 0, 1, 1], [], []>} : vector<16x64xf32>, vector<64x256xf32>, vector<16x256xf32> -> vector<16x256xf32>
    %46 = arith.mulf %45, %0 : vector<16x256xf32>
    %c0_42 = arith.constant 0 : index
    %c0_43 = arith.constant 0 : index
    %47 = vector.load %arg6[%c0_42, %c0_43] : memref<256x32xf32, #tpu.memory_space<vmem>>, vector<256x32xf32>
    %cst_44 = arith.constant dense<0.000000e+00> : vector<16x32xf32>
    %48 = tpu.matmul %46, %47, %cst_44 {dimension_numbers = #tpu.dot_dimension_numbers<[1], [0], [0], [1], [0, 0, 1, 1], [], []>} : vector<16x256xf32>, vector<256x32xf32>, vector<16x32xf32> -> vector<16x32xf32>
    %c0_45 = arith.constant 0 : index
    %c128 = arith.constant 128 : index
    %49 = vector.load %arg7[%c0_45, %c128] : memref<16x256xf32, #tpu.memory_space<vmem>>, vector<16x32xf32>
    tpu.vector_store %arg7[%c0_45, %c128], %48 {strides = array<i32>} : memref<16x256xf32, #tpu.memory_space<vmem>>, vector<16x32xf32>,
    %c5 = arith.constant 5 : index
    %c0_46 = arith.constant 0 : index
    %c0_47 = arith.constant 0 : index
    %50 = vector.load %arg5[%c5, %c0_46, %c0_47] : memref<8x64x256xf32, #tpu.memory_space<vmem>>, vector<1x64x256xf32>
    %51 = vector.shape_cast %50 : vector<1x64x256xf32> to vector<64x256xf32>
    %cst_48 = arith.constant dense<0.000000e+00> : vector<16x256xf32>
    %52 = tpu.matmul %14, %51, %cst_48 {dimension_numbers = #tpu.dot_dimension_numbers<[1], [0], [0], [1], [0, 0, 1, 1], [], []>} : vector<16x64xf32>, vector<64x256xf32>, vector<16x256xf32> -> vector<16x256xf32>
    %53 = arith.mulf %52, %0 : vector<16x256xf32>
    %c0_49 = arith.constant 0 : index
    %c0_50 = arith.constant 0 : index
    %54 = vector.load %arg6[%c0_49, %c0_50] : memref<256x32xf32, #tpu.memory_space<vmem>>, vector<256x32xf32>
    %cst_51 = arith.constant dense<0.000000e+00> : vector<16x32xf32>
    %55 = tpu.matmul %53, %54, %cst_51 {dimension_numbers = #tpu.dot_dimension_numbers<[1], [0], [0], [1], [0, 0, 1, 1], [], []>} : vector<16x256xf32>, vector<256x32xf32>, vector<16x32xf32> -> vector<16x32xf32>
    %c0_52 = arith.constant 0 : index
    %c160 = arith.constant 160 : index
    %56 = vector.load %arg7[%c0_52, %c160] : memref<16x256xf32, #tpu.memory_space<vmem>>, vector<16x32xf32>
    tpu.vector_store %arg7[%c0_52, %c160], %55 {strides = array<i32>} : memref<16x256xf32, #tpu.memory_space<vmem>>, vector<16x32xf32>,
    %c6 = arith.constant 6 : index
    %c0_53 = arith.constant 0 : index
    %c0_54 = arith.constant 0 : index
    %57 = vector.load %arg5[%c6, %c0_53, %c0_54] : memref<8x64x256xf32, #tpu.memory_space<vmem>>, vector<1x64x256xf32>
    %58 = vector.shape_cast %57 : vector<1x64x256xf32> to vector<64x256xf32>
    %cst_55 = arith.constant dense<0.000000e+00> : vector<16x256xf32>
    %59 = tpu.matmul %14, %58, %cst_55 {dimension_numbers = #tpu.dot_dimension_numbers<[1], [0], [0], [1], [0, 0, 1, 1], [], []>} : vector<16x64xf32>, vector<64x256xf32>, vector<16x256xf32> -> vector<16x256xf32>
    %60 = arith.mulf %59, %0 : vector<16x256xf32>
    %c0_56 = arith.constant 0 : index
    %c0_57 = arith.constant 0 : index
    %61 = vector.load %arg6[%c0_56, %c0_57] : memref<256x32xf32, #tpu.memory_space<vmem>>, vector<256x32xf32>
    %cst_58 = arith.constant dense<0.000000e+00> : vector<16x32xf32>
    %62 = tpu.matmul %60, %61, %cst_58 {dimension_numbers = #tpu.dot_dimension_numbers<[1], [0], [0], [1], [0, 0, 1, 1], [], []>} : vector<16x256xf32>, vector<256x32xf32>, vector<16x32xf32> -> vector<16x32xf32>
    %c0_59 = arith.constant 0 : index
    %c192 = arith.constant 192 : index
    %63 = vector.load %arg7[%c0_59, %c192] : memref<16x256xf32, #tpu.memory_space<vmem>>, vector<16x32xf32>
    tpu.vector_store %arg7[%c0_59, %c192], %62 {strides = array<i32>} : memref<16x256xf32, #tpu.memory_space<vmem>>, vector<16x32xf32>,
    %c7 = arith.constant 7 : index
    %c0_60 = arith.constant 0 : index
    %c0_61 = arith.constant 0 : index
    %64 = vector.load %arg5[%c7, %c0_60, %c0_61] : memref<8x64x256xf32, #tpu.memory_space<vmem>>, vector<1x64x256xf32>
    %65 = vector.shape_cast %64 : vector<1x64x256xf32> to vector<64x256xf32>
    %cst_62 = arith.constant dense<0.000000e+00> : vector<16x256xf32>
    %66 = tpu.matmul %14, %65, %cst_62 {dimension_numbers = #tpu.dot_dimension_numbers<[1], [0], [0], [1], [0, 0, 1, 1], [], []>} : vector<16x64xf32>, vector<64x256xf32>, vector<16x256xf32> -> vector<16x256xf32>
    %67 = arith.mulf %66, %0 : vector<16x256xf32>
    %c0_63 = arith.constant 0 : index
    %c0_64 = arith.constant 0 : index
    %68 = vector.load %arg6[%c0_63, %c0_64] : memref<256x32xf32, #tpu.memory_space<vmem>>, vector<256x32xf32>
    %cst_65 = arith.constant dense<0.000000e+00> : vector<16x32xf32>
    %69 = tpu.matmul %67, %68, %cst_65 {dimension_numbers = #tpu.dot_dimension_numbers<[1], [0], [0], [1], [0, 0, 1, 1], [], []>} : vector<16x256xf32>, vector<256x32xf32>, vector<16x32xf32> -> vector<16x32xf32>
    %c0_66 = arith.constant 0 : index
    %c224 = arith.constant 224 : index
    %70 = vector.load %arg7[%c0_66, %c224] : memref<16x256xf32, #tpu.memory_space<vmem>>, vector<16x32xf32>
    tpu.vector_store %arg7[%c0_66, %c224], %69 {strides = array<i32>} : memref<16x256xf32, #tpu.memory_space<vmem>>, vector<16x32xf32>,
    return
  }
  func.func @transform_0(%arg0: i32) -> (i32, i32) {
    %c0_i32 = arith.constant 0 : i32
    %c0_i32_0 = arith.constant 0 : i32
    return %arg0, %c0_i32 : i32, i32
  }
  func.func @transform_1(%arg0: i32) -> (i32, i32) {
    %c0_i32 = arith.constant 0 : i32
    %c0_i32_0 = arith.constant 0 : i32
    %c0_i32_1 = arith.constant 0 : i32
    return %c0_i32, %c0_i32_0 : i32, i32
  }
  func.func @transform_2(%arg0: i32) -> (i32, i32) {
    %c0_i32 = arith.constant 0 : i32
    %c0_i32_0 = arith.constant 0 : i32
    %c0_i32_1 = arith.constant 0 : i32
    return %c0_i32, %c0_i32_0 : i32, i32
  }
  func.func @transform_3(%arg0: i32) -> (i32, i32) {
    %c0_i32 = arith.constant 0 : i32
    %c0_i32_0 = arith.constant 0 : i32
    %c0_i32_1 = arith.constant 0 : i32
    return %c0_i32, %c0_i32_0 : i32, i32
  }
  func.func @transform_4(%arg0: i32) -> (i32, i32, i32) {
    %c0_i32 = arith.constant 0 : i32
    %c0_i32_0 = arith.constant 0 : i32
    %c0_i32_1 = arith.constant 0 : i32
    %c0_i32_2 = arith.constant 0 : i32
    return %c0_i32, %c0_i32_0, %c0_i32_1 : i32, i32, i32
  }
  func.func @transform_5(%arg0: i32) -> (i32, i32) {
    %c0_i32 = arith.constant 0 : i32
    %c0_i32_0 = arith.constant 0 : i32
    %c0_i32_1 = arith.constant 0 : i32
    return %c0_i32, %c0_i32_0 : i32, i32
  }
  func.func @transform_6(%arg0: i32) -> (i32, i32) {
    %c0_i32 = arith.constant 0 : i32
    %c0_i32_0 = arith.constant 0 : i32
    return %arg0, %c0_i32 : i32, i32
  }
}

</mosaic_0001>

<llo_original>
// kernel: tpu_custom_call.1
$region0: #{tpu_custom_call.1}
  #allocation0 [shape = 'u32[]', space=smem, size = 0x4, offset = 0x4, fixed_abs, tag = 'smem constant byte address 0x4 - core index']
  #allocation1 [shape = 'u32[144,128]{1,0:T(1,128)}', space=vmem, size = 0x12000, scoped, tag = 'internal scratch']
  %s0 = inlined_call_operand.vmem [shape: f32[32,256], index: 0, kind: input, shape index: {}]
  %s1 = inlined_call_operand.vmem [shape: f32[256,64], index: 1, kind: input, shape index: {}]
  %s2 = inlined_call_operand.vmem [shape: f32[1,64], index: 2, kind: input, shape index: {}]
  %s3 = inlined_call_operand.vmem [shape: f32[64,64], index: 3, kind: input, shape index: {}]
  %s4 = inlined_call_operand.hbm [shape: f32[8,64,256], index: 4, kind: input, shape index: {}]
  %s5 = inlined_call_operand.vmem [shape: f32[256,32], index: 5, kind: input, shape index: {}]
  %s6 = inlined_call_operand.hbm [shape: f32[32,256], index: 6, kind: output, shape index: {}]
  %s7 = sld [smem:[#allocation0]]
  $region61: #{tpu_custom_call.1} parent=0
    _
  %s9 = ssub.s32 1, %s7
  %s10 = scalar_select 0, %s9, %s7
  $region1: #{tpu_custom_call.1} parent=0
    #allocation2 [shape = 'u8[524288]{0}', space=vmem, size = 0x80000, scoped, tag = 'input window, operand 4, single buffered']
    #allocation3 [shape = 's32[2]{0}', space=sflag, size = 0x8, scoped, tag = 'scoped memory for tpu_custom_call.1']
    #allocation4 [shape = 's32[2]{0}', space=sflag, size = 0x8, scoped, tag = 'scoped memory for tpu_custom_call.1']
    #allocation5 [shape = 'u8[32768]{0}', space=vmem, size = 0x8000, scoped, tag = 'output window, operand 0']
    %11 = vsyncpa [#allocation3], 0
    %12 = vsyncpa [#allocation4], 0
    %s13 = scalar_lea.sflag [#allocation4], 1
    %14 = vsyncpa %s13, 0
    loop: start=0, step=1, limit=4
    $region2: #{tpu_custom_call.1} parent=1 // loop_pre_header
      _
    $region3: #{tpu_custom_call.1} parent=1 // loop_header
      %s16 = sphi 0, %s20
      %p17 = scmp.ge.s32.totalorder %s16, 4
      %s26 = sphi 0, %s28
      %s29 = sphi 0, %s26
      %s30 = sphi 0, %s29
      %s46 = sphi 0, %s30
      %s50 = sphi 0, %s50
      %s52 = sphi 0, %s50
      %s53 = sphi 0, %s52
      %s67 = sphi 0, %s53
      %s71 = sphi 0, %s71
      %s73 = sphi 0, %s71
      %s74 = sphi 0, %s73
      %s88 = sphi 0, %s74
      %s92 = sphi 0, %s92
      %s94 = sphi 0, %s92
      %s95 = sphi 0, %s94
      %s109 = sphi 0, %s95
      %s113 = sphi 0, %s113
      %s115 = sphi 0, %s113
      %s116 = sphi 0, %s115
      %s130 = sphi 0, %s116
      %s134 = sphi 0, %s134
      %s136 = sphi 0, %s134
      %s137 = sphi 0, %s136
      %s151 = sphi 0, %s137
      %s157 = sphi 0, %s159
      %s160 = sphi 0, %s157
      %s161 = sphi 0, %s160
      %s177 = sphi 0, %s161
    $region4: #{tpu_custom_call.1} parent=1 // loop_header_branch
      %19 = sbr.rel (%p17) target = $region8
    $region5: #{tpu_custom_call.1} parent=1 // loop_body
      %s21 = ssub.s32 %s16, 1
      %s22 = ssub.s32 %s16, 2
      %s23 = sadd.s32 %s16, 1
      %s24 = ssub.s32 %s16, %s23
      %p25 = scmp.eq.s32.totalorder %s24, 0
      %s27 = sadd.s32 %s26, 1
      %s28 = scalar_select %p25, %s26, %s27
      %p31 = pneg %p25
      %p32 = scmp.eq.s32.totalorder %s16, 1
      %p33 = por %p31, %p32
      %p34 = scmp.ne.s32.totalorder %s26, %s29
      %p35 = scmp.eq.s32.totalorder %s16, 0
      %p36 = por %p34, %p35
      %p37 = scmp.ne.s32.totalorder %s26, %s29
      %p38 = scmp.eq.s32.totalorder %s21, 1
      %p39 = por %p37, %p38
      %p40 = scmp.ne.s32.totalorder %s29, %s30
      %p41 = scmp.eq.s32.totalorder %s21, 0
      %p42 = por %p40, %p41
      %p43 = scmp.ne.s32.totalorder %s29, %s30
      %p44 = scmp.eq.s32.totalorder %s22, 1
      %p45 = por %p43, %p44
      %p47 = scmp.ne.s32.totalorder %s30, %s46
      %p48 = scmp.eq.s32.totalorder %s22, 0
      %p49 = por %p47, %p48
      %s51 = sadd.s32 %s50, 1
      %p54 = scmp.eq.s32.totalorder %s16, 1
      %p55 = scmp.ne.s32.totalorder %s50, %s52
      %p56 = scmp.eq.s32.totalorder %s16, 0
      %p57 = por %p55, %p56
      %p58 = scmp.ne.s32.totalorder %s50, %s52
      %p59 = scmp.eq.s32.totalorder %s21, 1
      %p60 = por %p58, %p59
      %p61 = scmp.ne.s32.totalorder %s52, %s53
      %p62 = scmp.eq.s32.totalorder %s21, 0
      %p63 = por %p61, %p62
      %p64 = scmp.ne.s32.totalorder %s52, %s53
      %p65 = scmp.eq.s32.totalorder %s22, 1
      %p66 = por %p64, %p65
      %p68 = scmp.ne.s32.totalorder %s53, %s67
      %p69 = scmp.eq.s32.totalorder %s22, 0
      %p70 = por %p68, %p69
      %s72 = sadd.s32 %s71, 1
      %p75 = scmp.eq.s32.totalorder %s16, 1
      %p76 = scmp.ne.s32.totalorder %s71, %s73
      %p77 = scmp.eq.s32.totalorder %s16, 0
      %p78 = por %p76, %p77
      %p79 = scmp.ne.s32.totalorder %s71, %s73
      %p80 = scmp.eq.s32.totalorder %s21, 1
      %p81 = por %p79, %p80
      %p82 = scmp.ne.s32.totalorder %s73, %s74
      %p83 = scmp.eq.s32.totalorder %s21, 0
      %p84 = por %p82, %p83
      %p85 = scmp.ne.s32.totalorder %s73, %s74
      %p86 = scmp.eq.s32.totalorder %s22, 1
      %p87 = por %p85, %p86
      %p89 = scmp.ne.s32.totalorder %s74, %s88
      %p90 = scmp.eq.s32.totalorder %s22, 0
      %p91 = por %p89, %p90
      %s93 = sadd.s32 %s92, 1
      %p96 = scmp.eq.s32.totalorder %s16, 1
      %p97 = scmp.ne.s32.totalorder %s92, %s94
      %p98 = scmp.eq.s32.totalorder %s16, 0
      %p99 = por %p97, %p98
      %p100 = scmp.ne.s32.totalorder %s92, %s94
      %p101 = scmp.eq.s32.totalorder %s21, 1
      %p102 = por %p100, %p101
      %p103 = scmp.ne.s32.totalorder %s94, %s95
      %p104 = scmp.eq.s32.totalorder %s21, 0
      %p105 = por %p103, %p104
      %p106 = scmp.ne.s32.totalorder %s94, %s95
      %p107 = scmp.eq.s32.totalorder %s22, 1
      %p108 = por %p106, %p107
      %p110 = scmp.ne.s32.totalorder %s95, %s109
      %p111 = scmp.eq.s32.totalorder %s22, 0
      %p112 = por %p110, %p111
      %s114 = sadd.s32 %s113, 1
      %p117 = scmp.eq.s32.totalorder %s16, 1
      %p118 = scmp.ne.s32.totalorder %s113, %s115
      %p119 = scmp.eq.s32.totalorder %s16, 0
      %p120 = por %p118, %p119
      %p121 = scmp.ne.s32.totalorder %s113, %s115
      %p122 = scmp.eq.s32.totalorder %s21, 1
      %p123 = por %p121, %p122
      %p124 = scmp.ne.s32.totalorder %s115, %s116
      %p125 = scmp.eq.s32.totalorder %s21, 0
      %p126 = por %p124, %p125
      %p127 = scmp.ne.s32.totalorder %s115, %s116
      %p128 = scmp.eq.s32.totalorder %s22, 1
      %p129 = por %p127, %p128
      %p131 = scmp.ne.s32.totalorder %s116, %s130
      %p132 = scmp.eq.s32.totalorder %s22, 0
      %p133 = por %p131, %p132
      %s135 = sadd.s32 %s134, 1
      %p138 = scmp.eq.s32.totalorder %s16, 1
      %p139 = scmp.ne.s32.totalorder %s134, %s136
      %p140 = scmp.eq.s32.totalorder %s16, 0
      %p141 = por %p139, %p140
      %p142 = scmp.ne.s32.totalorder %s134, %s136
      %p143 = scmp.eq.s32.totalorder %s21, 1
      %p144 = por %p142, %p143
      %p145 = scmp.ne.s32.totalorder %s136, %s137
      %p146 = scmp.eq.s32.totalorder %s21, 0
      %p147 = por %p145, %p146
      %p148 = scmp.ne.s32.totalorder %s136, %s137
      %p149 = scmp.eq.s32.totalorder %s22, 1
      %p150 = por %p148, %p149
      %p152 = scmp.ne.s32.totalorder %s137, %s151
      %p153 = scmp.eq.s32.totalorder %s22, 0
      %p154 = por %p152, %p153
      %s155 = ssub.s32 %s16, %s23
      %p156 = scmp.eq.s32.totalorder %s155, 0
      %s158 = sadd.s32 %s157, 1
      %s159 = scalar_select %p156, %s157, %s158
      %p162 = pneg %p156
      %p163 = scmp.eq.s32.totalorder %s16, 1
      %p164 = por %p162, %p163
      %p165 = scmp.ne.s32.totalorder %s157, %s160
      %p166 = scmp.eq.s32.totalorder %s16, 0
      %p167 = por %p165, %p166
      %p168 = scmp.ne.s32.totalorder %s157, %s160
      %p169 = scmp.eq.s32.totalorder %s21, 1
      %p170 = por %p168, %p169
      %p171 = scmp.ne.s32.totalorder %s160, %s161
      %p172 = scmp.eq.s32.totalorder %s21, 0
      %p173 = por %p171, %p172
      %p174 = scmp.ne.s32.totalorder %s160, %s161
      %p175 = scmp.eq.s32.totalorder %s22, 1
      %p176 = por %p174, %p175
      %p178 = scmp.ne.s32.totalorder %s161, %s177
      %p179 = scmp.eq.s32.totalorder %s22, 0
      %p180 = por %p178, %p179
      %p181 = scmp.le.s32.totalorder 1, %s16
      %p182 = scmp.lt.s32.totalorder %s16, 3
      %p183 = pnand %p181, %p182
      %p184 = pneg %p183
      // Predicated region
      $region9: #{tpu_custom_call.1} parent=5 // pred_check
        _
      $region10: #{tpu_custom_call.1} parent=5 // pred_check_branch
        %186 = sbr.rel (%p183) target = $region12
      $region11: #{tpu_custom_call.1} parent=5 // pred_region
        %s187 = ssub.s32 %s16, 1
        // Predicated region
        $region13: #{tpu_custom_call.1} parent=11 // pred_check
          %p188 = pneg %p63
        $region14: #{tpu_custom_call.1} parent=11 // pred_check_branch
          %190 = sbr.rel (%p188) target = $region16
        $region15: #{tpu_custom_call.1} parent=11 // pred_region
          _
        $region16: #{tpu_custom_call.1} parent=11 // pred_fallthru
          _
        // Predicated region
        $region17: #{tpu_custom_call.1} parent=11 // pred_check
          %p191 = pneg %p84
        $region18: #{tpu_custom_call.1} parent=11 // pred_check_branch
          %193 = sbr.rel (%p191) target = $region20
        $region19: #{tpu_custom_call.1} parent=11 // pred_region
          _
        $region20: #{tpu_custom_call.1} parent=11 // pred_fallthru
          _
        // Predicated region
        $region21: #{tpu_custom_call.1} parent=11 // pred_check
          %p194 = pneg %p105
        $region22: #{tpu_custom_call.1} parent=11 // pred_check_branch
          %196 = sbr.rel (%p194) target = $region24
        $region23: #{tpu_custom_call.1} parent=11 // pred_region
          _
        $region24: #{tpu_custom_call.1} parent=11 // pred_fallthru
          _
        // Predicated region
        $region25: #{tpu_custom_call.1} parent=11 // pred_check
          %p197 = pneg %p126
        $region26: #{tpu_custom_call.1} parent=11 // pred_check_branch
          %199 = sbr.rel (%p197) target = $region28
        $region27: #{tpu_custom_call.1} parent=11 // pred_region
          %s201 = ssub.s32 16384, 16384
          %202 = vsyncadd [#allocation3], %s201
          %s203 = sshll.u32 [#allocation2], 4
          %s204 = int_to_ptr.vmem [resolvable:$true] %s203
          %209 = dma.hbm_to_vmem [thread:$0]  %s4, 16384, %s204, [#allocation3], 256, 256, 16
        $region28: #{tpu_custom_call.1} parent=11 // pred_fallthru
          _
        // Predicated region
        $region29: #{tpu_custom_call.1} parent=11 // pred_check
          %p210 = pneg %p147
        $region30: #{tpu_custom_call.1} parent=11 // pred_check_branch
          %212 = sbr.rel (%p210) target = $region32
        $region31: #{tpu_custom_call.1} parent=11 // pred_region
          _
        $region32: #{tpu_custom_call.1} parent=11 // pred_fallthru
          _
      $region12: #{tpu_custom_call.1} parent=5 // pred_fallthru
        _
      %p213 = scmp.lt.s32.totalorder %s16, 2
      // Predicated region
      $region33: #{tpu_custom_call.1} parent=5 // pred_check
        %p214 = pneg %p213
      $region34: #{tpu_custom_call.1} parent=5 // pred_check_branch
        %216 = sbr.rel (%p214) target = $region36
      $region35: #{tpu_custom_call.1} parent=5 // pred_region
        // Predicated region
        $region37: #{tpu_custom_call.1} parent=35 // pred_check
          %p217 = pneg %p36
        $region38: #{tpu_custom_call.1} parent=35 // pred_check_branch
          %219 = sbr.rel (%p217) target = $region40
        $region39: #{tpu_custom_call.1} parent=35 // pred_region
          %s220 = smul.u32 2, %s16
          %p221 = scmp.lt.s32.totalorder %s220, 3
          %s222 = scalar_select %p221, %s220, 3
          %s223 = smul.addr %s222, 2
          %s224 = smul.addr %s223, 8
          %s225 = scalar_lea.vmem %s0, %s224
          %s226 = smul.u32 2, %s16
        $region40: #{tpu_custom_call.1} parent=35 // pred_fallthru
          _
      $region36: #{tpu_custom_call.1} parent=5 // pred_fallthru
        _
      %p227 = scmp.le.s32.totalorder 1, %s16
      %p228 = scmp.lt.s32.totalorder %s16, 3
      %p229 = pnand %p227, %p228
      %p230 = pneg %p229
      // Predicated region
      $region41: #{tpu_custom_call.1} parent=5 // pred_check
        _
      $region42: #{tpu_custom_call.1} parent=5 // pred_check_branch
        %232 = sbr.rel (%p229) target = $region44
      $region43: #{tpu_custom_call.1} parent=5 // pred_region
        %s233 = ssub.s32 %s16, 1
        // Predicated region
        $region45: #{tpu_custom_call.1} parent=43 // pred_check
          %p234 = pneg %p126
        $region46: #{tpu_custom_call.1} parent=43 // pred_check_branch
          %236 = sbr.rel (%p234) target = $region48
        $region47: #{tpu_custom_call.1} parent=43 // pred_region
          %237 = dma.done [#allocation3], 16384
        $region48: #{tpu_custom_call.1} parent=43 // pred_fallthru
          _
        %s238 = smul.u32 2, %s21
        %p239 = scmp.lt.s32.totalorder %s238, 3
        %s240 = scalar_select %p239, %s238, 3
        %s241 = smul.addr %s240, 2
        %s242 = smul.addr %s241, 8
        %s243 = scalar_lea.vmem %s0, %s242
        %p244 = pneg %p42
        %p245 = pneg %p39
        %p246 = pneg %p63
        %p247 = pneg %p60
        %p248 = pneg %p84
        %p249 = pneg %p81
        %p250 = pneg %p105
        %p251 = pneg %p102
        %p252 = pneg %p126
        %p253 = pneg %p123
        %p254 = pneg %p147
        %p255 = pneg %p144
        %p256 = pneg %p173
        %p257 = pneg %p170
        %s258 = sand.u32 %s160, 1
        %s259 = scalar_lea.sflag [#allocation4], %s258
        %s260 = sand.u32 %s160, 1
        %s261 = smul.addr %s260, 32
        %s262 = scalar_lea.vmem [#allocation5], %s261
        %s263 = smul.u32 2, %s21
        %p264 = scmp.lt.s32.totalorder %s263, 3
        %s265 = scalar_select %p264, %s263, 3
        %s266 = smul.addr %s265, 2
        %s267 = smul.addr %s266, 8
        %s268 = scalar_lea.vmem %s0, %s267
        %s269 = smul.u32 2, %s21
        %s270 = smul.u32 2, %s21
        %v271 = vld [vmem:[%s268] sm:$0xff]
        %v272 = vld [vmem:[%s268 + $0x8] sm:$0xff]
        %v273 = vld [vmem:[%s268 + $0x10] sm:$0xff]
        %v274 = vld [vmem:[%s268 + $0x18] sm:$0xff]
        %v275 = vld [vmem:[%s1] sm:$0xff]
        %v276 = vld [vmem:[%s1 + $0x8] sm:$0xff]
        %v277 = vld [vmem:[%s1 + $0x10] sm:$0xff]
        %v278 = vld [vmem:[%s1 + $0x18] sm:$0xff]
        %v279 = vld [vmem:[%s1 + $0x20] sm:$0xff]
        %v280 = vld [vmem:[%s1 + $0x28] sm:$0xff]
        %v281 = vld [vmem:[%s1 + $0x30] sm:$0xff]
        %v282 = vld [vmem:[%s1 + $0x38] sm:$0xff]
        %v283 = vld [vmem:[%s1 + $0x40] sm:$0xff]
        %v284 = vld [vmem:[%s1 + $0x48] sm:$0xff]
        %v285 = vld [vmem:[%s1 + $0x50] sm:$0xff]
        %v286 = vld [vmem:[%s1 + $0x58] sm:$0xff]
        %v287 = vld [vmem:[%s1 + $0x60] sm:$0xff]
        %v288 = vld [vmem:[%s1 + $0x68] sm:$0xff]
        %v289 = vld [vmem:[%s1 + $0x70] sm:$0xff]
        %v290 = vld [vmem:[%s1 + $0x78] sm:$0xff]
        %v291 = vld [vmem:[%s1 + $0x80] sm:$0xff]
        %v292 = vld [vmem:[%s1 + $0x88] sm:$0xff]
        %v293 = vld [vmem:[%s1 + $0x90] sm:$0xff]
        %v294 = vld [vmem:[%s1 + $0x98] sm:$0xff]
        %v295 = vld [vmem:[%s1 + $0xa0] sm:$0xff]
        %v296 = vld [vmem:[%s1 + $0xa8] sm:$0xff]
        %v297 = vld [vmem:[%s1 + $0xb0] sm:$0xff]
        %v298 = vld [vmem:[%s1 + $0xb8] sm:$0xff]
        %v299 = vld [vmem:[%s1 + $0xc0] sm:$0xff]
        %v300 = vld [vmem:[%s1 + $0xc8] sm:$0xff]
        %v301 = vld [vmem:[%s1 + $0xd0] sm:$0xff]
        %v302 = vld [vmem:[%s1 + $0xd8] sm:$0xff]
        %v303 = vld [vmem:[%s1 + $0xe0] sm:$0xff]
        %v304 = vld [vmem:[%s1 + $0xe8] sm:$0xff]
        %v305 = vld [vmem:[%s1 + $0xf0] sm:$0xff]
        %v306 = vld [vmem:[%s1 + $0xf8] sm:$0xff]
        %v307 = vld [vmem:[%s2] sm:$0x1]
        %v309 = vlaneseq
        %v310 = vshrl.u32 %v309, 7
        %v311 = vsub.s32 0, %v310
        %v312 = vrot.slane %v307, %v311
        %314 = vmatprep.subr.mxu0 0.0
        %315 = vmatpush1.msra.mxu0 %v275
        %316 = vmatprep.subr.mxu0 0.0
        %317 = vmatpush1.msra.mxu0 %v276
        %318 = vmatprep.subr.mxu0 0.0
        %319 = vmatpush1.msra.mxu0 %v277
        %320 = vmatprep.subr.mxu0 0.0
        %321 = vmatpush1.msra.mxu0 %v278
        %322 = vmatprep.subr.mxu0 0.0
        %323 = vmatpush1.msra.mxu0 %v279
        %324 = vmatprep.subr.mxu0 0.0
        %325 = vmatpush1.msra.mxu0 %v280
        %326 = vmatprep.subr.mxu0 0.0
        %327 = vmatpush1.msra.mxu0 %v281
        %328 = vmatprep.subr.mxu0 0.0
        %329 = vmatpush1.msra.mxu0 %v282
        %330 = vmatprep.subr.mxu0 0.0
        %331 = vmatpush1.msra.mxu0 %v283
        %332 = vmatprep.subr.mxu0 0.0
        %333 = vmatpush1.msra.mxu0 %v284
        %334 = vmatprep.subr.mxu0 0.0
        %335 = vmatpush1.msra.mxu0 %v285
        %336 = vmatprep.subr.mxu0 0.0
        %337 = vmatpush1.msra.mxu0 %v286
        %338 = vmatprep.subr.mxu0 0.0
        %339 = vmatpush1.msra.mxu0 %v287
        %340 = vmatprep.subr.mxu0 0.0
        %341 = vmatpush1.msra.mxu0 %v288
        %342 = vmatprep.subr.mxu0 0.0
        %343 = vmatpush1.msra.mxu0 %v289
        %344 = vmatprep.subr.mxu0 0.0
        %345 = vmatpush1.msra.mxu0 %v290
        %346 = vmatprep.subr.mxu0 0.0
        %347 = vmatpush1.msra.mxu0 %v291
        %348 = vmatprep.subr.mxu0 0.0
        %349 = vmatpush1.msra.mxu0 %v292
        %350 = vmatprep.subr.mxu0 0.0
        %351 = vmatpush1.msra.mxu0 %v293
        %352 = vmatprep.subr.mxu0 0.0
        %353 = vmatpush1.msra.mxu0 %v294
        %354 = vmatprep.subr.mxu0 0.0
        %355 = vmatpush1.msra.mxu0 %v295
        %356 = vmatprep.subr.mxu0 0.0
        %357 = vmatpush1.msra.mxu0 %v296
        %358 = vmatprep.subr.mxu0 0.0
        %359 = vmatpush1.msra.mxu0 %v297
        %360 = vmatprep.subr.mxu0 0.0
        %361 = vmatpush1.msra.mxu0 %v298
        %362 = vmatprep.subr.mxu0 0.0
        %363 = vmatpush1.msra.mxu0 %v299
        %364 = vmatprep.subr.mxu0 0.0
        %365 = vmatpush1.msra.mxu0 %v300
        %366 = vmatprep.subr.mxu0 0.0
        %367 = vmatpush1.msra.mxu0 %v301
        %368 = vmatprep.subr.mxu0 0.0
        %369 = vmatpush1.msra.mxu0 %v302
        %370 = vmatprep.subr.mxu0 0.0
        %371 = vmatpush1.msra.mxu0 %v303
        %372 = vmatprep.subr.mxu0 0.0
        %373 = vmatpush1.msra.mxu0 %v304
        %374 = vmatprep.subr.mxu0 0.0
        %375 = vmatpush1.msra.mxu0 %v305
        %376 = vmatprep.subr.mxu0 0.0
        %377 = vmatpush1.msra.mxu0 %v306
        %378 = vmatprep.mubr.f32.mxu0 %v272
        %379 = vmatmul.mubr.f32.gmra.mrb[0].mxu0 %v271
        %v380 = vpop.f32.mrb[0].mxu0
        %v381 = vadd.f32 %v312, %v380
        %v382 = vpop.f32.mrb[0].mxu0
        %383 = vmatprep.mubr.f32.mxu0 %v274
        %384 = vmatmul.mubr.f32.gmra.mrb[0].mxu0 %v273
        %v385 = vpop.f32.mrb[0].mxu0
        %v386 = vadd.f32 %v312, %v385
        %v387 = vpop.f32.mrb[0].mxu0
        %388 = vdwg.mxu0
        %vm389 = vcmask 523264
        %v390 = vsel %vm389, %v381, -inf
        %391 = vmax.xlane.f32.xlu0 %v390
        %v392 = vpop.xlane.xlu0 %391
        %v393 = vsel %vm389, %v386, -inf
        %394 = vmax.xlane.f32.xlu0 %v393
        %v395 = vpop.xlane.xlu0 %394
        %v396 = vsub.f32 %v381, %v392
        %v397 = vsub.f32 %v386, %v395
        %v398 = vmul.f32 %v396, 1.442695
        %v399 = vpow.pop %v398
        %v400 = vmul.f32 %v397, 1.442695
        %v401 = vpow.pop %v400
        %v402 = vld [vmem:[%s3] sm:$0xff]
        %v403 = vld [vmem:[%s3 + $0x8] sm:$0xff]
        %v404 = vld [vmem:[%s3 + $0x10] sm:$0xff]
        %v405 = vld [vmem:[%s3 + $0x18] sm:$0xff]
        %v406 = vld [vmem:[%s3 + $0x20] sm:$0xff]
        %v407 = vld [vmem:[%s3 + $0x28] sm:$0xff]
        %v408 = vld [vmem:[%s3 + $0x30] sm:$0xff]
        %v409 = vld [vmem:[%s3 + $0x38] sm:$0xff]
        %v411 = vsel %vm389, %v399, 0
        %v414 = vsel %vm389, %v401, 0
        %416 = vmatprep.subr.mxu0 0.0
        %417 = vmatpush1.msra.mxu0 %v402
        %418 = vmatprep.subr.mxu0 0.0
        %419 = vmatpush1.msra.mxu0 %v403
        %420 = vmatprep.subr.mxu0 0.0
        %421 = vmatpush1.msra.mxu0 %v404
        %422 = vmatprep.subr.mxu0 0.0
        %423 = vmatpush1.msra.mxu0 %v405
        %424 = vmatprep.subr.mxu0 0.0
        %425 = vmatpush1.msra.mxu0 %v406
        %426 = vmatprep.subr.mxu0 0.0
        %427 = vmatpush1.msra.mxu0 %v407
        %428 = vmatprep.subr.mxu0 0.0
        %429 = vmatpush1.msra.mxu0 %v408
        %430 = vmatprep.subr.mxu0 0.0
        %431 = vmatpush1.msra.mxu0 %v409
        %432 = vmatprep.subr.mxu0 0.0
        %433 = vmatpush1.msra.mxu0 0.0
        %434 = vmatprep.subr.mxu0 0.0
        %435 = vmatpush1.msra.mxu0 0.0
        %436 = vmatprep.subr.mxu0 0.0
        %437 = vmatpush1.msra.mxu0 0.0
        %438 = vmatprep.subr.mxu0 0.0
        %439 = vmatpush1.msra.mxu0 0.0
        %440 = vmatprep.subr.mxu0 0.0
        %441 = vmatpush1.msra.mxu0 0.0
        %442 = vmatprep.subr.mxu0 0.0
        %443 = vmatpush1.msra.mxu0 0.0
        %444 = vmatprep.subr.mxu0 0.0
        %445 = vmatpush1.msra.mxu0 0.0
        %446 = vmatprep.subr.mxu0 0.0
        %447 = vmatpush1.msra.mxu0 0.0
        %448 = vmatprep.subr.mxu0 0.0
        %449 = vmatpush1.msra.mxu0 0.0
        %450 = vmatprep.subr.mxu0 0.0
        %451 = vmatpush1.msra.mxu0 0.0
        %452 = vmatprep.subr.mxu0 0.0
        %453 = vmatpush1.msra.mxu0 0.0
        %454 = vmatprep.subr.mxu0 0.0
        %455 = vmatpush1.msra.mxu0 0.0
        %456 = vmatprep.subr.mxu0 0.0
        %457 = vmatpush1.msra.mxu0 0.0
        %458 = vmatprep.subr.mxu0 0.0
        %459 = vmatpush1.msra.mxu0 0.0
        %460 = vmatprep.subr.mxu0 0.0
        %461 = vmatpush1.msra.mxu0 0.0
        %462 = vmatprep.subr.mxu0 0.0
        %463 = vmatpush1.msra.mxu0 0.0
        %464 = vmatprep.subr.mxu0 0.0
        %465 = vmatpush1.msra.mxu0 0.0
        %466 = vmatprep.subr.mxu0 0.0
        %467 = vmatpush1.msra.mxu0 0.0
        %468 = vmatprep.subr.mxu0 0.0
        %469 = vmatpush1.msra.mxu0 0.0
        %470 = vmatprep.subr.mxu0 0.0
        %471 = vmatpush1.msra.mxu0 0.0
        %472 = vmatprep.subr.mxu0 0.0
        %473 = vmatpush1.msra.mxu0 0.0
        %474 = vmatprep.subr.mxu0 0.0
        %475 = vmatpush1.msra.mxu0 0.0
        %476 = vmatprep.subr.mxu0 0.0
        %477 = vmatpush1.msra.mxu0 0.0
        %478 = vmatprep.subr.mxu0 0.0
        %479 = vmatpush1.msra.mxu0 0.0
        %480 = vmatprep.mubr.f32.mxu0 0.0
        %481 = vmatmul.mubr.f32.gmra.mrb[0].mxu0 %v411
        %v482 = vpop.f32.mrb[0].mxu0
        %v483 = vadd.f32 0.0, %v482
        %v484 = vpop.f32.mrb[0].mxu0
        %485 = vmatprep.mubr.f32.mxu0 0.0
        %486 = vmatmul.mubr.f32.gmra.mrb[0].mxu0 %v414
        %v487 = vpop.f32.mrb[0].mxu0
        %v488 = vadd.f32 0.0, %v487
        %v489 = vpop.f32.mrb[0].mxu0
        %490 = vdwg.mxu0
        %v491 = vrcp.pop %v483
        %v492 = vrcp.pop %v488
        %v493 = vmul.f32 %v399, %v491
        %v494 = vmul.f32 %v401, %v492
        %v495 = vld [vmem:[#allocation2] sm:$0xff]
        %v496 = vld [vmem:[#allocation2 + $0x8] sm:$0xff]
        %v497 = vld [vmem:[#allocation2 + $0x10] sm:$0xff]
        %v498 = vld [vmem:[#allocation2 + $0x18] sm:$0xff]
        %v499 = vld [vmem:[#allocation2 + $0x20] sm:$0xff]
        %v500 = vld [vmem:[#allocation2 + $0x28] sm:$0xff]
        %v501 = vld [vmem:[#allocation2 + $0x30] sm:$0xff]
        %v502 = vld [vmem:[#allocation2 + $0x38] sm:$0xff]
        %v503 = vld [vmem:[#allocation2 + $0x40] sm:$0xff]
        %v504 = vld [vmem:[#allocation2 + $0x48] sm:$0xff]
        %v505 = vld [vmem:[#allocation2 + $0x50] sm:$0xff]
        %v506 = vld [vmem:[#allocation2 + $0x58] sm:$0xff]
        %v507 = vld [vmem:[#allocation2 + $0x60] sm:$0xff]
        %v508 = vld [vmem:[#allocation2 + $0x68] sm:$0xff]
        %v509 = vld [vmem:[#allocation2 + $0x70] sm:$0xff]
        %v510 = vld [vmem:[#allocation2 + $0x78] sm:$0xff]
        %v512 = vsel %vm389, %v493, 0
        %v515 = vsel %vm389, %v494, 0
        %517 = vmatprep.subr.mxu0 %v496
        %518 = vmatpush1.msra.mxu0 %v495
        %519 = vmatprep.subr.mxu0 %v498
        %520 = vmatpush1.msra.mxu0 %v497
        %521 = vmatprep.subr.mxu0 %v500
        %522 = vmatpush1.msra.mxu0 %v499
        %523 = vmatprep.subr.mxu0 %v502
        %524 = vmatpush1.msra.mxu0 %v501
        %525 = vmatprep.subr.mxu0 %v504
        %526 = vmatpush1.msra.mxu0 %v503
        %527 = vmatprep.subr.mxu0 %v506
        %528 = vmatpush1.msra.mxu0 %v505
        %529 = vmatprep.subr.mxu0 %v508
        %530 = vmatpush1.msra.mxu0 %v507
        %531 = vmatprep.subr.mxu0 %v510
        %532 = vmatpush1.msra.mxu0 %v509
        %533 = vmatprep.subr.mxu0 0.0
        %534 = vmatpush1.msra.mxu0 0.0
        %535 = vmatprep.subr.mxu0 0.0
        %536 = vmatpush1.msra.mxu0 0.0
        %537 = vmatprep.subr.mxu0 0.0
        %538 = vmatpush1.msra.mxu0 0.0
        %539 = vmatprep.subr.mxu0 0.0
        %540 = vmatpush1.msra.mxu0 0.0
        %541 = vmatprep.subr.mxu0 0.0
        %542 = vmatpush1.msra.mxu0 0.0
        %543 = vmatprep.subr.mxu0 0.0
        %544 = vmatpush1.msra.mxu0 0.0
        %545 = vmatprep.subr.mxu0 0.0
        %546 = vmatpush1.msra.mxu0 0.0
        %547 = vmatprep.subr.mxu0 0.0
        %548 = vmatpush1.msra.mxu0 0.0
        %549 = vmatprep.subr.mxu0 0.0
        %550 = vmatpush1.msra.mxu0 0.0
        %551 = vmatprep.subr.mxu0 0.0
        %552 = vmatpush1.msra.mxu0 0.0
        %553 = vmatprep.subr.mxu0 0.0
        %554 = vmatpush1.msra.mxu0 0.0
        %555 = vmatprep.subr.mxu0 0.0
        %556 = vmatpush1.msra.mxu0 0.0
        %557 = vmatprep.subr.mxu0 0.0
        %558 = vmatpush1.msra.mxu0 0.0
        %559 = vmatprep.subr.mxu0 0.0
        %560 = vmatpush1.msra.mxu0 0.0
        %561 = vmatprep.subr.mxu0 0.0
        %562 = vmatpush1.msra.mxu0 0.0
        %563 = vmatprep.subr.mxu0 0.0
        %564 = vmatpush1.msra.mxu0 0.0
        %565 = vmatprep.subr.mxu0 0.0
        %566 = vmatpush1.msra.mxu0 0.0
        %567 = vmatprep.subr.mxu0 0.0
        %568 = vmatpush1.msra.mxu0 0.0
        %569 = vmatprep.subr.mxu0 0.0
        %570 = vmatpush1.msra.mxu0 0.0
        %571 = vmatprep.subr.mxu0 0.0
        %572 = vmatpush1.msra.mxu0 0.0
        %573 = vmatprep.subr.mxu0 0.0
        %574 = vmatpush1.msra.mxu0 0.0
        %575 = vmatprep.subr.mxu0 0.0
        %576 = vmatpush1.msra.mxu0 0.0
        %577 = vmatprep.subr.mxu0 0.0
        %578 = vmatpush1.msra.mxu0 0.0
        %579 = vmatprep.subr.mxu0 0.0
        %580 = vmatpush1.msra.mxu0 0.0
        %581 = vmatprep.mubr.f32.mxu0 0.0
        %582 = vmatmul.mubr.f32.gmra.mrb[0].mxu0 %v512
        %v583 = vpop.f32.mrb[0].mxu0
        %v584 = vadd.f32 0.0, %v583
        %v585 = vpop.f32.mrb[0].mxu0
        %v586 = vadd.f32 0.0, %v585
        %587 = vmatprep.mubr.f32.mxu0 0.0
        %588 = vmatmul.mubr.f32.gmra.mrb[0].mxu0 %v515
        %v589 = vpop.f32.mrb[0].mxu0
        %v590 = vadd.f32 0.0, %v589
        %v591 = vpop.f32.mrb[0].mxu0
        %v592 = vadd.f32 0.0, %v591
        %593 = vdwg.mxu0
        %v594 = vmul.f32 %v584, %v271
        %v595 = vmul.f32 %v586, %v272
        %v596 = vmul.f32 %v590, %v273
        %v597 = vmul.f32 %v592, %v274
        %v598 = vld [vmem:[%s5] sm:$0xff]
        %v599 = vld [vmem:[%s5 + $0x8] sm:$0xff]
        %v600 = vld [vmem:[%s5 + $0x10] sm:$0xff]
        %v601 = vld [vmem:[%s5 + $0x18] sm:$0xff]
        %v602 = vld [vmem:[%s5 + $0x20] sm:$0xff]
        %v603 = vld [vmem:[%s5 + $0x28] sm:$0xff]
        %v604 = vld [vmem:[%s5 + $0x30] sm:$0xff]
        %v605 = vld [vmem:[%s5 + $0x38] sm:$0xff]
        %v606 = vld [vmem:[%s5 + $0x40] sm:$0xff]
        %v607 = vld [vmem:[%s5 + $0x48] sm:$0xff]
        %v608 = vld [vmem:[%s5 + $0x50] sm:$0xff]
        %v609 = vld [vmem:[%s5 + $0x58] sm:$0xff]
        %v610 = vld [vmem:[%s5 + $0x60] sm:$0xff]
        %v611 = vld [vmem:[%s5 + $0x68] sm:$0xff]
        %v612 = vld [vmem:[%s5 + $0x70] sm:$0xff]
        %v613 = vld [vmem:[%s5 + $0x78] sm:$0xff]
        %v614 = vld [vmem:[%s5 + $0x80] sm:$0xff]
        %v615 = vld [vmem:[%s5 + $0x88] sm:$0xff]
        %v616 = vld [vmem:[%s5 + $0x90] sm:$0xff]
        %v617 = vld [vmem:[%s5 + $0x98] sm:$0xff]
        %v618 = vld [vmem:[%s5 + $0xa0] sm:$0xff]
        %v619 = vld [vmem:[%s5 + $0xa8] sm:$0xff]
        %v620 = vld [vmem:[%s5 + $0xb0] sm:$0xff]
        %v621 = vld [vmem:[%s5 + $0xb8] sm:$0xff]
        %v622 = vld [vmem:[%s5 + $0xc0] sm:$0xff]
        %v623 = vld [vmem:[%s5 + $0xc8] sm:$0xff]
        %v624 = vld [vmem:[%s5 + $0xd0] sm:$0xff]
        %v625 = vld [vmem:[%s5 + $0xd8] sm:$0xff]
        %v626 = vld [vmem:[%s5 + $0xe0] sm:$0xff]
        %v627 = vld [vmem:[%s5 + $0xe8] sm:$0xff]
        %v628 = vld [vmem:[%s5 + $0xf0] sm:$0xff]
        %v629 = vld [vmem:[%s5 + $0xf8] sm:$0xff]
        %630 = vmatprep.subr.mxu0 0.0
        %631 = vmatpush1.msra.mxu0 %v598
        %632 = vmatprep.subr.mxu0 0.0
        %633 = vmatpush1.msra.mxu0 %v599
        %634 = vmatprep.subr.mxu0 0.0
        %635 = vmatpush1.msra.mxu0 %v600
        %636 = vmatprep.subr.mxu0 0.0
        %637 = vmatpush1.msra.mxu0 %v601
        %638 = vmatprep.subr.mxu0 0.0
        %639 = vmatpush1.msra.mxu0 %v602
        %640 = vmatprep.subr.mxu0 0.0
        %641 = vmatpush1.msra.mxu0 %v603
        %642 = vmatprep.subr.mxu0 0.0
        %643 = vmatpush1.msra.mxu0 %v604
        %644 = vmatprep.subr.mxu0 0.0
        %645 = vmatpush1.msra.mxu0 %v605
        %646 = vmatprep.subr.mxu0 0.0
        %647 = vmatpush1.msra.mxu0 %v606
        %648 = vmatprep.subr.mxu0 0.0
        %649 = vmatpush1.msra.mxu0 %v607
        %650 = vmatprep.subr.mxu0 0.0
        %651 = vmatpush1.msra.mxu0 %v608
        %652 = vmatprep.subr.mxu0 0.0
        %653 = vmatpush1.msra.mxu0 %v609
        %654 = vmatprep.subr.mxu0 0.0
        %655 = vmatpush1.msra.mxu0 %v610
        %656 = vmatprep.subr.mxu0 0.0
        %657 = vmatpush1.msra.mxu0 %v611
        %658 = vmatprep.subr.mxu0 0.0
        %659 = vmatpush1.msra.mxu0 %v612
        %660 = vmatprep.subr.mxu0 0.0
        %661 = vmatpush1.msra.mxu0 %v613
        %662 = vmatprep.subr.mxu0 0.0
        %663 = vmatpush1.msra.mxu0 %v614
        %664 = vmatprep.subr.mxu0 0.0
        %665 = vmatpush1.msra.mxu0 %v615
        %666 = vmatprep.subr.mxu0 0.0
        %667 = vmatpush1.msra.mxu0 %v616
        %668 = vmatprep.subr.mxu0 0.0
        %669 = vmatpush1.msra.mxu0 %v617
        %670 = vmatprep.subr.mxu0 0.0
        %671 = vmatpush1.msra.mxu0 %v618
        %672 = vmatprep.subr.mxu0 0.0
        %673 = vmatpush1.msra.mxu0 %v619
        %674 = vmatprep.subr.mxu0 0.0
        %675 = vmatpush1.msra.mxu0 %v620
        %676 = vmatprep.subr.mxu0 0.0
        %677 = vmatpush1.msra.mxu0 %v621
        %678 = vmatprep.subr.mxu0 0.0
        %679 = vmatpush1.msra.mxu0 %v622
        %680 = vmatprep.subr.mxu0 0.0
        %681 = vmatpush1.msra.mxu0 %v623
        %682 = vmatprep.subr.mxu0 0.0
        %683 = vmatpush1.msra.mxu0 %v624
        %684 = vmatprep.subr.mxu0 0.0
        %685 = vmatpush1.msra.mxu0 %v625
        %686 = vmatprep.subr.mxu0 0.0
        %687 = vmatpush1.msra.mxu0 %v626
        %688 = vmatprep.subr.mxu0 0.0
        %689 = vmatpush1.msra.mxu0 %v627
        %690 = vmatprep.subr.mxu0 0.0
        %691 = vmatpush1.msra.mxu0 %v628
        %692 = vmatprep.subr.mxu0 0.0
        %693 = vmatpush1.msra.mxu0 %v629
        %694 = vmatprep.mubr.f32.mxu0 %v595
        %695 = vmatmul.mubr.f32.gmra.mrb[0].mxu0 %v594
        %v696 = vpop.f32.mrb[0].mxu0
        %v697 = vadd.f32 0.0, %v696
        %v698 = vpop.f32.mrb[0].mxu0
        %699 = vmatprep.mubr.f32.mxu0 %v597
        %700 = vmatmul.mubr.f32.gmra.mrb[0].mxu0 %v596
        %v701 = vpop.f32.mrb[0].mxu0
        %v702 = vadd.f32 0.0, %v701
        %v703 = vpop.f32.mrb[0].mxu0
        %704 = vdwg.mxu0
        %vm705 = vcmask 261120
        %706 = vst.msk [vmem:[%s262] sm:$0xff] %vm705, %v697
        %707 = vst.msk [vmem:[%s262 + $0x10] sm:$0xff] %vm705, %v702
        %s708 = scalar_lea.vmem [#allocation2], 128
        %v709 = vld [vmem:[%s708] sm:$0xff]
        %v710 = vld [vmem:[%s708 + $0x8] sm:$0xff]
        %v711 = vld [vmem:[%s708 + $0x10] sm:$0xff]
        %v712 = vld [vmem:[%s708 + $0x18] sm:$0xff]
        %v713 = vld [vmem:[%s708 + $0x20] sm:$0xff]
        %v714 = vld [vmem:[%s708 + $0x28] sm:$0xff]
        %v715 = vld [vmem:[%s708 + $0x30] sm:$0xff]
        %v716 = vld [vmem:[%s708 + $0x38] sm:$0xff]
        %v717 = vld [vmem:[%s708 + $0x40] sm:$0xff]
        %v718 = vld [vmem:[%s708 + $0x48] sm:$0xff]
        %v719 = vld [vmem:[%s708 + $0x50] sm:$0xff]
        %v720 = vld [vmem:[%s708 + $0x58] sm:$0xff]
        %v721 = vld [vmem:[%s708 + $0x60] sm:$0xff]
        %v722 = vld [vmem:[%s708 + $0x68] sm:$0xff]
        %v723 = vld [vmem:[%s708 + $0x70] sm:$0xff]
        %v724 = vld [vmem:[%s708 + $0x78] sm:$0xff]
        %725 = vmatprep.subr.mxu0 %v710
        %726 = vmatpush1.msra.mxu0 %v709
        %727 = vmatprep.subr.mxu0 %v712
        %728 = vmatpush1.msra.mxu0 %v711
        %729 = vmatprep.subr.mxu0 %v714
        %730 = vmatpush1.msra.mxu0 %v713
        %731 = vmatprep.subr.mxu0 %v716
        %732 = vmatpush1.msra.mxu0 %v715
        %733 = vmatprep.subr.mxu0 %v718
        %734 = vmatpush1.msra.mxu0 %v717
        %735 = vmatprep.subr.mxu0 %v720
        %736 = vmatpush1.msra.mxu0 %v719
        %737 = vmatprep.subr.mxu0 %v722
        %738 = vmatpush1.msra.mxu0 %v721
        %739 = vmatprep.subr.mxu0 %v724
        %740 = vmatpush1.msra.mxu0 %v723
        %741 = vmatprep.subr.mxu0 0.0
        %742 = vmatpush1.msra.mxu0 0.0
        %743 = vmatprep.subr.mxu0 0.0
        %744 = vmatpush1.msra.mxu0 0.0
        %745 = vmatprep.subr.mxu0 0.0
        %746 = vmatpush1.msra.mxu0 0.0
        %747 = vmatprep.subr.mxu0 0.0
        %748 = vmatpush1.msra.mxu0 0.0
        %749 = vmatprep.subr.mxu0 0.0
        %750 = vmatpush1.msra.mxu0 0.0
        %751 = vmatprep.subr.mxu0 0.0
        %752 = vmatpush1.msra.mxu0 0.0
        %753 = vmatprep.subr.mxu0 0.0
        %754 = vmatpush1.msra.mxu0 0.0
        %755 = vmatprep.subr.mxu0 0.0
        %756 = vmatpush1.msra.mxu0 0.0
        %757 = vmatprep.subr.mxu0 0.0
        %758 = vmatpush1.msra.mxu0 0.0
        %759 = vmatprep.subr.mxu0 0.0
        %760 = vmatpush1.msra.mxu0 0.0
        %761 = vmatprep.subr.mxu0 0.0
        %762 = vmatpush1.msra.mxu0 0.0
        %763 = vmatprep.subr.mxu0 0.0
        %764 = vmatpush1.msra.mxu0 0.0
        %765 = vmatprep.subr.mxu0 0.0
        %766 = vmatpush1.msra.mxu0 0.0
        %767 = vmatprep.subr.mxu0 0.0
        %768 = vmatpush1.msra.mxu0 0.0
        %769 = vmatprep.subr.mxu0 0.0
        %770 = vmatpush1.msra.mxu0 0.0
        %771 = vmatprep.subr.mxu0 0.0
        %772 = vmatpush1.msra.mxu0 0.0
        %773 = vmatprep.subr.mxu0 0.0
        %774 = vmatpush1.msra.mxu0 0.0
        %775 = vmatprep.subr.mxu0 0.0
        %776 = vmatpush1.msra.mxu0 0.0
        %777 = vmatprep.subr.mxu0 0.0
        %778 = vmatpush1.msra.mxu0 0.0
        %779 = vmatprep.subr.mxu0 0.0
        %780 = vmatpush1.msra.mxu0 0.0
        %781 = vmatprep.subr.mxu0 0.0
        %782 = vmatpush1.msra.mxu0 0.0
        %783 = vmatprep.subr.mxu0 0.0
        %784 = vmatpush1.msra.mxu0 0.0
        %785 = vmatprep.subr.mxu0 0.0
        %786 = vmatpush1.msra.mxu0 0.0
        %787 = vmatprep.subr.mxu0 0.0
        %788 = vmatpush1.msra.mxu0 0.0
        %789 = vmatprep.mubr.f32.mxu0 0.0
        %790 = vmatmul.mubr.f32.gmra.mrb[0].mxu0 %v512
        %v791 = vpop.f32.mrb[0].mxu0
        %v792 = vadd.f32 0.0, %v791
        %v793 = vpop.f32.mrb[0].mxu0
        %v794 = vadd.f32 0.0, %v793
        %795 = vmatprep.mubr.f32.mxu0 0.0
        %796 = vmatmul.mubr.f32.gmra.mrb[0].mxu0 %v515
        %v797 = vpop.f32.mrb[0].mxu0
        %v798 = vadd.f32 0.0, %v797
        %v799 = vpop.f32.mrb[0].mxu0
        %v800 = vadd.f32 0.0, %v799
        %801 = vdwg.mxu0
        %v802 = vmul.f32 %v792, %v271
        %v803 = vmul.f32 %v794, %v272
        %v804 = vmul.f32 %v798, %v273
        %v805 = vmul.f32 %v800, %v274
        %v806 = vld [vmem:[%s5] sm:$0xff]
        %v807 = vld [vmem:[%s5 + $0x8] sm:$0xff]
        %v808 = vld [vmem:[%s5 + $0x10] sm:$0xff]
        %v809 = vld [vmem:[%s5 + $0x18] sm:$0xff]
        %v810 = vld [vmem:[%s5 + $0x20] sm:$0xff]
        %v811 = vld [vmem:[%s5 + $0x28] sm:$0xff]
        %v812 = vld [vmem:[%s5 + $0x30] sm:$0xff]
        %v813 = vld [vmem:[%s5 + $0x38] sm:$0xff]
        %v814 = vld [vmem:[%s5 + $0x40] sm:$0xff]
        %v815 = vld [vmem:[%s5 + $0x48] sm:$0xff]
        %v816 = vld [vmem:[%s5 + $0x50] sm:$0xff]
        %v817 = vld [vmem:[%s5 + $0x58] sm:$0xff]
        %v818 = vld [vmem:[%s5 + $0x60] sm:$0xff]
        %v819 = vld [vmem:[%s5 + $0x68] sm:$0xff]
        %v820 = vld [vmem:[%s5 + $0x70] sm:$0xff]
        %v821 = vld [vmem:[%s5 + $0x78] sm:$0xff]
        %v822 = vld [vmem:[%s5 + $0x80] sm:$0xff]
        %v823 = vld [vmem:[%s5 + $0x88] sm:$0xff]
        %v824 = vld [vmem:[%s5 + $0x90] sm:$0xff]
        %v825 = vld [vmem:[%s5 + $0x98] sm:$0xff]
        %v826 = vld [vmem:[%s5 + $0xa0] sm:$0xff]
        %v827 = vld [vmem:[%s5 + $0xa8] sm:$0xff]
        %v828 = vld [vmem:[%s5 + $0xb0] sm:$0xff]
        %v829 = vld [vmem:[%s5 + $0xb8] sm:$0xff]
        %v830 = vld [vmem:[%s5 + $0xc0] sm:$0xff]
        %v831 = vld [vmem:[%s5 + $0xc8] sm:$0xff]
        %v832 = vld [vmem:[%s5 + $0xd0] sm:$0xff]
        %v833 = vld [vmem:[%s5 + $0xd8] sm:$0xff]
        %v834 = vld [vmem:[%s5 + $0xe0] sm:$0xff]
        %v835 = vld [vmem:[%s5 + $0xe8] sm:$0xff]
        %v836 = vld [vmem:[%s5 + $0xf0] sm:$0xff]
        %v837 = vld [vmem:[%s5 + $0xf8] sm:$0xff]
        %838 = vmatprep.subr.mxu0 0.0
        %839 = vmatpush1.msra.mxu0 %v806
        %840 = vmatprep.subr.mxu0 0.0
        %841 = vmatpush1.msra.mxu0 %v807
        %842 = vmatprep.subr.mxu0 0.0
        %843 = vmatpush1.msra.mxu0 %v808
        %844 = vmatprep.subr.mxu0 0.0
        %845 = vmatpush1.msra.mxu0 %v809
        %846 = vmatprep.subr.mxu0 0.0
        %847 = vmatpush1.msra.mxu0 %v810
        %848 = vmatprep.subr.mxu0 0.0
        %849 = vmatpush1.msra.mxu0 %v811
        %850 = vmatprep.subr.mxu0 0.0
        %851 = vmatpush1.msra.mxu0 %v812
        %852 = vmatprep.subr.mxu0 0.0
        %853 = vmatpush1.msra.mxu0 %v813
        %854 = vmatprep.subr.mxu0 0.0
        %855 = vmatpush1.msra.mxu0 %v814
        %856 = vmatprep.subr.mxu0 0.0
        %857 = vmatpush1.msra.mxu0 %v815
        %858 = vmatprep.subr.mxu0 0.0
        %859 = vmatpush1.msra.mxu0 %v816
        %860 = vmatprep.subr.mxu0 0.0
        %861 = vmatpush1.msra.mxu0 %v817
        %862 = vmatprep.subr.mxu0 0.0
        %863 = vmatpush1.msra.mxu0 %v818
        %864 = vmatprep.subr.mxu0 0.0
        %865 = vmatpush1.msra.mxu0 %v819
        %866 = vmatprep.subr.mxu0 0.0
        %867 = vmatpush1.msra.mxu0 %v820
        %868 = vmatprep.subr.mxu0 0.0
        %869 = vmatpush1.msra.mxu0 %v821
        %870 = vmatprep.subr.mxu0 0.0
        %871 = vmatpush1.msra.mxu0 %v822
        %872 = vmatprep.subr.mxu0 0.0
        %873 = vmatpush1.msra.mxu0 %v823
        %874 = vmatprep.subr.mxu0 0.0
        %875 = vmatpush1.msra.mxu0 %v824
        %876 = vmatprep.subr.mxu0 0.0
        %877 = vmatpush1.msra.mxu0 %v825
        %878 = vmatprep.subr.mxu0 0.0
        %879 = vmatpush1.msra.mxu0 %v826
        %880 = vmatprep.subr.mxu0 0.0
        %881 = vmatpush1.msra.mxu0 %v827
        %882 = vmatprep.subr.mxu0 0.0
        %883 = vmatpush1.msra.mxu0 %v828
        %884 = vmatprep.subr.mxu0 0.0
        %885 = vmatpush1.msra.mxu0 %v829
        %886 = vmatprep.subr.mxu0 0.0
        %887 = vmatpush1.msra.mxu0 %v830
        %888 = vmatprep.subr.mxu0 0.0
        %889 = vmatpush1.msra.mxu0 %v831
        %890 = vmatprep.subr.mxu0 0.0
        %891 = vmatpush1.msra.mxu0 %v832
        %892 = vmatprep.subr.mxu0 0.0
        %893 = vmatpush1.msra.mxu0 %v833
        %894 = vmatprep.subr.mxu0 0.0
        %895 = vmatpush1.msra.mxu0 %v834
        %896 = vmatprep.subr.mxu0 0.0
        %897 = vmatpush1.msra.mxu0 %v835
        %898 = vmatprep.subr.mxu0 0.0
        %899 = vmatpush1.msra.mxu0 %v836
        %900 = vmatprep.subr.mxu0 0.0
        %901 = vmatpush1.msra.mxu0 %v837
        %902 = vmatprep.mubr.f32.mxu0 %v803
        %903 = vmatmul.mubr.f32.gmra.mrb[0].mxu0 %v802
        %v904 = vpop.f32.mrb[0].mxu0
        %v905 = vadd.f32 0.0, %v904
        %v906 = vpop.f32.mrb[0].mxu0
        %907 = vmatprep.mubr.f32.mxu0 %v805
        %908 = vmatmul.mubr.f32.gmra.mrb[0].mxu0 %v804
        %v909 = vpop.f32.mrb[0].mxu0
        %v910 = vadd.f32 0.0, %v909
        %v911 = vpop.f32.mrb[0].mxu0
        %912 = vdwg.mxu0
        %915 = vrot.lane.b32.xlu0 %v905, 32
        %v916 = vpop.permute.xlu0 %915
        %917 = vrot.lane.b32.xlu0 %v910, 32
        %v918 = vpop.permute.xlu0 %917
        %vm921 = vcmask 523520
        %922 = vst.msk [vmem:[%s262] sm:$0xff] %vm921, %v916
        %923 = vst.msk [vmem:[%s262 + $0x10] sm:$0xff] %vm921, %v918
        %s924 = scalar_lea.vmem [#allocation2], 256
        %v925 = vld [vmem:[%s924] sm:$0xff]
        %v926 = vld [vmem:[%s924 + $0x8] sm:$0xff]
        %v927 = vld [vmem:[%s924 + $0x10] sm:$0xff]
        %v928 = vld [vmem:[%s924 + $0x18] sm:$0xff]
        %v929 = vld [vmem:[%s924 + $0x20] sm:$0xff]
        %v930 = vld [vmem:[%s924 + $0x28] sm:$0xff]
        %v931 = vld [vmem:[%s924 + $0x30] sm:$0xff]
        %v932 = vld [vmem:[%s924 + $0x38] sm:$0xff]
        %v933 = vld [vmem:[%s924 + $0x40] sm:$0xff]
        %v934 = vld [vmem:[%s924 + $0x48] sm:$0xff]
        %v935 = vld [vmem:[%s924 + $0x50] sm:$0xff]
        %v936 = vld [vmem:[%s924 + $0x58] sm:$0xff]
        %v937 = vld [vmem:[%s924 + $0x60] sm:$0xff]
        %v938 = vld [vmem:[%s924 + $0x68] sm:$0xff]
        %v939 = vld [vmem:[%s924 + $0x70] sm:$0xff]
        %v940 = vld [vmem:[%s924 + $0x78] sm:$0xff]
        %941 = vmatprep.subr.mxu0 %v926
        %942 = vmatpush1.msra.mxu0 %v925
        %943 = vmatprep.subr.mxu0 %v928
        %944 = vmatpush1.msra.mxu0 %v927
        %945 = vmatprep.subr.mxu0 %v930
        %946 = vmatpush1.msra.mxu0 %v929
        %947 = vmatprep.subr.mxu0 %v932
        %948 = vmatpush1.msra.mxu0 %v931
        %949 = vmatprep.subr.mxu0 %v934
        %950 = vmatpush1.msra.mxu0 %v933
        %951 = vmatprep.subr.mxu0 %v936
        %952 = vmatpush1.msra.mxu0 %v935
        %953 = vmatprep.subr.mxu0 %v938
        %954 = vmatpush1.msra.mxu0 %v937
        %955 = vmatprep.subr.mxu0 %v940
        %956 = vmatpush1.msra.mxu0 %v939
        %957 = vmatprep.subr.mxu0 0.0
        %958 = vmatpush1.msra.mxu0 0.0
        %959 = vmatprep.subr.mxu0 0.0
        %960 = vmatpush1.msra.mxu0 0.0
        %961 = vmatprep.subr.mxu0 0.0
        %962 = vmatpush1.msra.mxu0 0.0
        %963 = vmatprep.subr.mxu0 0.0
        %964 = vmatpush1.msra.mxu0 0.0
        %965 = vmatprep.subr.mxu0 0.0
        %966 = vmatpush1.msra.mxu0 0.0
        %967 = vmatprep.subr.mxu0 0.0
        %968 = vmatpush1.msra.mxu0 0.0
        %969 = vmatprep.subr.mxu0 0.0
        %970 = vmatpush1.msra.mxu0 0.0
        %971 = vmatprep.subr.mxu0 0.0
        %972 = vmatpush1.msra.mxu0 0.0
        %973 = vmatprep.subr.mxu0 0.0
        %974 = vmatpush1.msra.mxu0 0.0
        %975 = vmatprep.subr.mxu0 0.0
        %976 = vmatpush1.msra.mxu0 0.0
        %977 = vmatprep.subr.mxu0 0.0
        %978 = vmatpush1.msra.mxu0 0.0
        %979 = vmatprep.subr.mxu0 0.0
        %980 = vmatpush1.msra.mxu0 0.0
        %981 = vmatprep.subr.mxu0 0.0
        %982 = vmatpush1.msra.mxu0 0.0
        %983 = vmatprep.subr.mxu0 0.0
        %984 = vmatpush1.msra.mxu0 0.0
        %985 = vmatprep.subr.mxu0 0.0
        %986 = vmatpush1.msra.mxu0 0.0
        %987 = vmatprep.subr.mxu0 0.0
        %988 = vmatpush1.msra.mxu0 0.0
        %989 = vmatprep.subr.mxu0 0.0
        %990 = vmatpush1.msra.mxu0 0.0
        %991 = vmatprep.subr.mxu0 0.0
        %992 = vmatpush1.msra.mxu0 0.0
        %993 = vmatprep.subr.mxu0 0.0
        %994 = vmatpush1.msra.mxu0 0.0
        %995 = vmatprep.subr.mxu0 0.0
        %996 = vmatpush1.msra.mxu0 0.0
        %997 = vmatprep.subr.mxu0 0.0
        %998 = vmatpush1.msra.mxu0 0.0
        %999 = vmatprep.subr.mxu0 0.0
        %1000 = vmatpush1.msra.mxu0 0.0
        %1001 = vmatprep.subr.mxu0 0.0
        %1002 = vmatpush1.msra.mxu0 0.0
        %1003 = vmatprep.subr.mxu0 0.0
        %1004 = vmatpush1.msra.mxu0 0.0
        %1005 = vmatprep.mubr.f32.mxu0 0.0
        %1006 = vmatmul.mubr.f32.gmra.mrb[0].mxu0 %v512
        %v1007 = vpop.f32.mrb[0].mxu0
        %v1008 = vadd.f32 0.0, %v1007
        %v1009 = vpop.f32.mrb[0].mxu0
        %v1010 = vadd.f32 0.0, %v1009
        %1011 = vmatprep.mubr.f32.mxu0 0.0
        %1012 = vmatmul.mubr.f32.gmra.mrb[0].mxu0 %v515
        %v1013 = vpop.f32.mrb[0].mxu0
        %v1014 = vadd.f32 0.0, %v1013
        %v1015 = vpop.f32.mrb[0].mxu0
        %v1016 = vadd.f32 0.0, %v1015
        %1017 = vdwg.mxu0
        %v1018 = vmul.f32 %v1008, %v271
        %v1019 = vmul.f32 %v1010, %v272
        %v1020 = vmul.f32 %v1014, %v273
        %v1021 = vmul.f32 %v1016, %v274
        %v1022 = vld [vmem:[%s5] sm:$0xff]
        %v1023 = vld [vmem:[%s5 + $0x8] sm:$0xff]
        %v1024 = vld [vmem:[%s5 + $0x10] sm:$0xff]
        %v1025 = vld [vmem:[%s5 + $0x18] sm:$0xff]
        %v1026 = vld [vmem:[%s5 + $0x20] sm:$0xff]
        %v1027 = vld [vmem:[%s5 + $0x28] sm:$0xff]
        %v1028 = vld [vmem:[%s5 + $0x30] sm:$0xff]
        %v1029 = vld [vmem:[%s5 + $0x38] sm:$0xff]
        %v1030 = vld [vmem:[%s5 + $0x40] sm:$0xff]
        %v1031 = vld [vmem:[%s5 + $0x48] sm:$0xff]
        %v1032 = vld [vmem:[%s5 + $0x50] sm:$0xff]
        %v1033 = vld [vmem:[%s5 + $0x58] sm:$0xff]
        %v1034 = vld [vmem:[%s5 + $0x60] sm:$0xff]
        %v1035 = vld [vmem:[%s5 + $0x68] sm:$0xff]
        %v1036 = vld [vmem:[%s5 + $0x70] sm:$0xff]
        %v1037 = vld [vmem:[%s5 + $0x78] sm:$0xff]
        %v1038 = vld [vmem:[%s5 + $0x80] sm:$0xff]
        %v1039 = vld [vmem:[%s5 + $0x88] sm:$0xff]
        %v1040 = vld [vmem:[%s5 + $0x90] sm:$0xff]
        %v1041 = vld [vmem:[%s5 + $0x98] sm:$0xff]
        %v1042 = vld [vmem:[%s5 + $0xa0] sm:$0xff]
        %v1043 = vld [vmem:[%s5 + $0xa8] sm:$0xff]
        %v1044 = vld [vmem:[%s5 + $0xb0] sm:$0xff]
        %v1045 = vld [vmem:[%s5 + $0xb8] sm:$0xff]
        %v1046 = vld [vmem:[%s5 + $0xc0] sm:$0xff]
        %v1047 = vld [vmem:[%s5 + $0xc8] sm:$0xff]
        %v1048 = vld [vmem:[%s5 + $0xd0] sm:$0xff]
        %v1049 = vld [vmem:[%s5 + $0xd8] sm:$0xff]
        %v1050 = vld [vmem:[%s5 + $0xe0] sm:$0xff]
        %v1051 = vld [vmem:[%s5 + $0xe8] sm:$0xff]
        %v1052 = vld [vmem:[%s5 + $0xf0] sm:$0xff]
        %v1053 = vld [vmem:[%s5 + $0xf8] sm:$0xff]
        %1054 = vmatprep.subr.mxu0 0.0
        %1055 = vmatpush1.msra.mxu0 %v1022
        %1056 = vmatprep.subr.mxu0 0.0
        %1057 = vmatpush1.msra.mxu0 %v1023
        %1058 = vmatprep.subr.mxu0 0.0
        %1059 = vmatpush1.msra.mxu0 %v1024
        %1060 = vmatprep.subr.mxu0 0.0
        %1061 = vmatpush1.msra.mxu0 %v1025
        %1062 = vmatprep.subr.mxu0 0.0
        %1063 = vmatpush1.msra.mxu0 %v1026
        %1064 = vmatprep.subr.mxu0 0.0
        %1065 = vmatpush1.msra.mxu0 %v1027
        %1066 = vmatprep.subr.mxu0 0.0
        %1067 = vmatpush1.msra.mxu0 %v1028
        %1068 = vmatprep.subr.mxu0 0.0
        %1069 = vmatpush1.msra.mxu0 %v1029
        %1070 = vmatprep.subr.mxu0 0.0
        %1071 = vmatpush1.msra.mxu0 %v1030
        %1072 = vmatprep.subr.mxu0 0.0
        %1073 = vmatpush1.msra.mxu0 %v1031
        %1074 = vmatprep.subr.mxu0 0.0
        %1075 = vmatpush1.msra.mxu0 %v1032
        %1076 = vmatprep.subr.mxu0 0.0
        %1077 = vmatpush1.msra.mxu0 %v1033
        %1078 = vmatprep.subr.mxu0 0.0
        %1079 = vmatpush1.msra.mxu0 %v1034
        %1080 = vmatprep.subr.mxu0 0.0
        %1081 = vmatpush1.msra.mxu0 %v1035
        %1082 = vmatprep.subr.mxu0 0.0
        %1083 = vmatpush1.msra.mxu0 %v1036
        %1084 = vmatprep.subr.mxu0 0.0
        %1085 = vmatpush1.msra.mxu0 %v1037
        %1086 = vmatprep.subr.mxu0 0.0
        %1087 = vmatpush1.msra.mxu0 %v1038
        %1088 = vmatprep.subr.mxu0 0.0
        %1089 = vmatpush1.msra.mxu0 %v1039
        %1090 = vmatprep.subr.mxu0 0.0
        %1091 = vmatpush1.msra.mxu0 %v1040
        %1092 = vmatprep.subr.mxu0 0.0
        %1093 = vmatpush1.msra.mxu0 %v1041
        %1094 = vmatprep.subr.mxu0 0.0
        %1095 = vmatpush1.msra.mxu0 %v1042
        %1096 = vmatprep.subr.mxu0 0.0
        %1097 = vmatpush1.msra.mxu0 %v1043
        %1098 = vmatprep.subr.mxu0 0.0
        %1099 = vmatpush1.msra.mxu0 %v1044
        %1100 = vmatprep.subr.mxu0 0.0
        %1101 = vmatpush1.msra.mxu0 %v1045
        %1102 = vmatprep.subr.mxu0 0.0
        %1103 = vmatpush1.msra.mxu0 %v1046
        %1104 = vmatprep.subr.mxu0 0.0
        %1105 = vmatpush1.msra.mxu0 %v1047
        %1106 = vmatprep.subr.mxu0 0.0
        %1107 = vmatpush1.msra.mxu0 %v1048
        %1108 = vmatprep.subr.mxu0 0.0
        %1109 = vmatpush1.msra.mxu0 %v1049
        %1110 = vmatprep.subr.mxu0 0.0
        %1111 = vmatpush1.msra.mxu0 %v1050
        %1112 = vmatprep.subr.mxu0 0.0
        %1113 = vmatpush1.msra.mxu0 %v1051
        %1114 = vmatprep.subr.mxu0 0.0
        %1115 = vmatpush1.msra.mxu0 %v1052
        %1116 = vmatprep.subr.mxu0 0.0
        %1117 = vmatpush1.msra.mxu0 %v1053
        %1118 = vmatprep.mubr.f32.mxu0 %v1019
        %1119 = vmatmul.mubr.f32.gmra.mrb[0].mxu0 %v1018
        %v1120 = vpop.f32.mrb[0].mxu0
        %v1121 = vadd.f32 0.0, %v1120
        %v1122 = vpop.f32.mrb[0].mxu0
        %1123 = vmatprep.mubr.f32.mxu0 %v1021
        %1124 = vmatmul.mubr.f32.gmra.mrb[0].mxu0 %v1020
        %v1125 = vpop.f32.mrb[0].mxu0
        %v1126 = vadd.f32 0.0, %v1125
        %v1127 = vpop.f32.mrb[0].mxu0
        %1128 = vdwg.mxu0
        %1131 = vrot.lane.b32.xlu0 %v1121, 64
        %v1132 = vpop.permute.xlu0 %1131
        %1133 = vrot.lane.b32.xlu0 %v1126, 64
        %v1134 = vpop.permute.xlu0 %1133
        %vm1137 = vcmask 785920
        %1138 = vst.msk [vmem:[%s262] sm:$0xff] %vm1137, %v1132
        %1139 = vst.msk [vmem:[%s262 + $0x10] sm:$0xff] %vm1137, %v1134
        %s1140 = scalar_lea.vmem [#allocation2], 384
        %v1141 = vld [vmem:[%s1140] sm:$0xff]
        %v1142 = vld [vmem:[%s1140 + $0x8] sm:$0xff]
        %v1143 = vld [vmem:[%s1140 + $0x10] sm:$0xff]
        %v1144 = vld [vmem:[%s1140 + $0x18] sm:$0xff]
        %v1145 = vld [vmem:[%s1140 + $0x20] sm:$0xff]
        %v1146 = vld [vmem:[%s1140 + $0x28] sm:$0xff]
        %v1147 = vld [vmem:[%s1140 + $0x30] sm:$0xff]
        %v1148 = vld [vmem:[%s1140 + $0x38] sm:$0xff]
        %v1149 = vld [vmem:[%s1140 + $0x40] sm:$0xff]
        %v1150 = vld [vmem:[%s1140 + $0x48] sm:$0xff]
        %v1151 = vld [vmem:[%s1140 + $0x50] sm:$0xff]
        %v1152 = vld [vmem:[%s1140 + $0x58] sm:$0xff]
        %v1153 = vld [vmem:[%s1140 + $0x60] sm:$0xff]
        %v1154 = vld [vmem:[%s1140 + $0x68] sm:$0xff]
        %v1155 = vld [vmem:[%s1140 + $0x70] sm:$0xff]
        %v1156 = vld [vmem:[%s1140 + $0x78] sm:$0xff]
        %1157 = vmatprep.subr.mxu0 %v1142
        %1158 = vmatpush1.msra.mxu0 %v1141
        %1159 = vmatprep.subr.mxu0 %v1144
        %1160 = vmatpush1.msra.mxu0 %v1143
        %1161 = vmatprep.subr.mxu0 %v1146
        %1162 = vmatpush1.msra.mxu0 %v1145
        %1163 = vmatprep.subr.mxu0 %v1148
        %1164 = vmatpush1.msra.mxu0 %v1147
        %1165 = vmatprep.subr.mxu0 %v1150
        %1166 = vmatpush1.msra.mxu0 %v1149
        %1167 = vmatprep.subr.mxu0 %v1152
        %1168 = vmatpush1.msra.mxu0 %v1151
        %1169 = vmatprep.subr.mxu0 %v1154
        %1170 = vmatpush1.msra.mxu0 %v1153
        %1171 = vmatprep.subr.mxu0 %v1156
        %1172 = vmatpush1.msra.mxu0 %v1155
        %1173 = vmatprep.subr.mxu0 0.0
        %1174 = vmatpush1.msra.mxu0 0.0
        %1175 = vmatprep.subr.mxu0 0.0
        %1176 = vmatpush1.msra.mxu0 0.0
        %1177 = vmatprep.subr.mxu0 0.0
        %1178 = vmatpush1.msra.mxu0 0.0
        %1179 = vmatprep.subr.mxu0 0.0
        %1180 = vmatpush1.msra.mxu0 0.0
        %1181 = vmatprep.subr.mxu0 0.0
        %1182 = vmatpush1.msra.mxu0 0.0
        %1183 = vmatprep.subr.mxu0 0.0
        %1184 = vmatpush1.msra.mxu0 0.0
        %1185 = vmatprep.subr.mxu0 0.0
        %1186 = vmatpush1.msra.mxu0 0.0
        %1187 = vmatprep.subr.mxu0 0.0
        %1188 = vmatpush1.msra.mxu0 0.0
        %1189 = vmatprep.subr.mxu0 0.0
        %1190 = vmatpush1.msra.mxu0 0.0
        %1191 = vmatprep.subr.mxu0 0.0
        %1192 = vmatpush1.msra.mxu0 0.0
        %1193 = vmatprep.subr.mxu0 0.0
        %1194 = vmatpush1.msra.mxu0 0.0
        %1195 = vmatprep.subr.mxu0 0.0
        %1196 = vmatpush1.msra.mxu0 0.0
        %1197 = vmatprep.subr.mxu0 0.0
        %1198 = vmatpush1.msra.mxu0 0.0
        %1199 = vmatprep.subr.mxu0 0.0
        %1200 = vmatpush1.msra.mxu0 0.0
        %1201 = vmatprep.subr.mxu0 0.0
        %1202 = vmatpush1.msra.mxu0 0.0
        %1203 = vmatprep.subr.mxu0 0.0
        %1204 = vmatpush1.msra.mxu0 0.0
        %1205 = vmatprep.subr.mxu0 0.0
        %1206 = vmatpush1.msra.mxu0 0.0
        %1207 = vmatprep.subr.mxu0 0.0
        %1208 = vmatpush1.msra.mxu0 0.0
        %1209 = vmatprep.subr.mxu0 0.0
        %1210 = vmatpush1.msra.mxu0 0.0
        %1211 = vmatprep.subr.mxu0 0.0
        %1212 = vmatpush1.msra.mxu0 0.0
        %1213 = vmatprep.subr.mxu0 0.0
        %1214 = vmatpush1.msra.mxu0 0.0
        %1215 = vmatprep.subr.mxu0 0.0
        %1216 = vmatpush1.msra.mxu0 0.0
        %1217 = vmatprep.subr.mxu0 0.0
        %1218 = vmatpush1.msra.mxu0 0.0
        %1219 = vmatprep.subr.mxu0 0.0
        %1220 = vmatpush1.msra.mxu0 0.0
        %1221 = vmatprep.mubr.f32.mxu0 0.0
        %1222 = vmatmul.mubr.f32.gmra.mrb[0].mxu0 %v512
        %v1223 = vpop.f32.mrb[0].mxu0
        %v1224 = vadd.f32 0.0, %v1223
        %v1225 = vpop.f32.mrb[0].mxu0
        %v1226 = vadd.f32 0.0, %v1225
        %1227 = vmatprep.mubr.f32.mxu0 0.0
        %1228 = vmatmul.mubr.f32.gmra.mrb[0].mxu0 %v515
        %v1229 = vpop.f32.mrb[0].mxu0
        %v1230 = vadd.f32 0.0, %v1229
        %v1231 = vpop.f32.mrb[0].mxu0
        %v1232 = vadd.f32 0.0, %v1231
        %1233 = vdwg.mxu0
        %v1234 = vmul.f32 %v1224, %v271
        %v1235 = vmul.f32 %v1226, %v272
        %v1236 = vmul.f32 %v1230, %v273
        %v1237 = vmul.f32 %v1232, %v274
        %v1238 = vld [vmem:[%s5] sm:$0xff]
        %v1239 = vld [vmem:[%s5 + $0x8] sm:$0xff]
        %v1240 = vld [vmem:[%s5 + $0x10] sm:$0xff]
        %v1241 = vld [vmem:[%s5 + $0x18] sm:$0xff]
        %v1242 = vld [vmem:[%s5 + $0x20] sm:$0xff]
        %v1243 = vld [vmem:[%s5 + $0x28] sm:$0xff]
        %v1244 = vld [vmem:[%s5 + $0x30] sm:$0xff]
        %v1245 = vld [vmem:[%s5 + $0x38] sm:$0xff]
        %v1246 = vld [vmem:[%s5 + $0x40] sm:$0xff]
        %v1247 = vld [vmem:[%s5 + $0x48] sm:$0xff]
        %v1248 = vld [vmem:[%s5 + $0x50] sm:$0xff]
        %v1249 = vld [vmem:[%s5 + $0x58] sm:$0xff]
        %v1250 = vld [vmem:[%s5 + $0x60] sm:$0xff]
        %v1251 = vld [vmem:[%s5 + $0x68] sm:$0xff]
        %v1252 = vld [vmem:[%s5 + $0x70] sm:$0xff]
        %v1253 = vld [vmem:[%s5 + $0x78] sm:$0xff]
        %v1254 = vld [vmem:[%s5 + $0x80] sm:$0xff]
        %v1255 = vld [vmem:[%s5 + $0x88] sm:$0xff]
        %v1256 = vld [vmem:[%s5 + $0x90] sm:$0xff]
        %v1257 = vld [vmem:[%s5 + $0x98] sm:$0xff]
        %v1258 = vld [vmem:[%s5 + $0xa0] sm:$0xff]
        %v1259 = vld [vmem:[%s5 + $0xa8] sm:$0xff]
        %v1260 = vld [vmem:[%s5 + $0xb0] sm:$0xff]
        %v1261 = vld [vmem:[%s5 + $0xb8] sm:$0xff]
        %v1262 = vld [vmem:[%s5 + $0xc0] sm:$0xff]
        %v1263 = vld [vmem:[%s5 + $0xc8] sm:$0xff]
        %v1264 = vld [vmem:[%s5 + $0xd0] sm:$0xff]
        %v1265 = vld [vmem:[%s5 + $0xd8] sm:$0xff]
        %v1266 = vld [vmem:[%s5 + $0xe0] sm:$0xff]
        %v1267 = vld [vmem:[%s5 + $0xe8] sm:$0xff]
        %v1268 = vld [vmem:[%s5 + $0xf0] sm:$0xff]
        %v1269 = vld [vmem:[%s5 + $0xf8] sm:$0xff]
        %1270 = vmatprep.subr.mxu0 0.0
        %1271 = vmatpush1.msra.mxu0 %v1238
        %1272 = vmatprep.subr.mxu0 0.0
        %1273 = vmatpush1.msra.mxu0 %v1239
        %1274 = vmatprep.subr.mxu0 0.0
        %1275 = vmatpush1.msra.mxu0 %v1240
        %1276 = vmatprep.subr.mxu0 0.0
        %1277 = vmatpush1.msra.mxu0 %v1241
        %1278 = vmatprep.subr.mxu0 0.0
        %1279 = vmatpush1.msra.mxu0 %v1242
        %1280 = vmatprep.subr.mxu0 0.0
        %1281 = vmatpush1.msra.mxu0 %v1243
        %1282 = vmatprep.subr.mxu0 0.0
        %1283 = vmatpush1.msra.mxu0 %v1244
        %1284 = vmatprep.subr.mxu0 0.0
        %1285 = vmatpush1.msra.mxu0 %v1245
        %1286 = vmatprep.subr.mxu0 0.0
        %1287 = vmatpush1.msra.mxu0 %v1246
        %1288 = vmatprep.subr.mxu0 0.0
        %1289 = vmatpush1.msra.mxu0 %v1247
        %1290 = vmatprep.subr.mxu0 0.0
        %1291 = vmatpush1.msra.mxu0 %v1248
        %1292 = vmatprep.subr.mxu0 0.0
        %1293 = vmatpush1.msra.mxu0 %v1249
        %1294 = vmatprep.subr.mxu0 0.0
        %1295 = vmatpush1.msra.mxu0 %v1250
        %1296 = vmatprep.subr.mxu0 0.0
        %1297 = vmatpush1.msra.mxu0 %v1251
        %1298 = vmatprep.subr.mxu0 0.0
        %1299 = vmatpush1.msra.mxu0 %v1252
        %1300 = vmatprep.subr.mxu0 0.0
        %1301 = vmatpush1.msra.mxu0 %v1253
        %1302 = vmatprep.subr.mxu0 0.0
        %1303 = vmatpush1.msra.mxu0 %v1254
        %1304 = vmatprep.subr.mxu0 0.0
        %1305 = vmatpush1.msra.mxu0 %v1255
        %1306 = vmatprep.subr.mxu0 0.0
        %1307 = vmatpush1.msra.mxu0 %v1256
        %1308 = vmatprep.subr.mxu0 0.0
        %1309 = vmatpush1.msra.mxu0 %v1257
        %1310 = vmatprep.subr.mxu0 0.0
        %1311 = vmatpush1.msra.mxu0 %v1258
        %1312 = vmatprep.subr.mxu0 0.0
        %1313 = vmatpush1.msra.mxu0 %v1259
        %1314 = vmatprep.subr.mxu0 0.0
        %1315 = vmatpush1.msra.mxu0 %v1260
        %1316 = vmatprep.subr.mxu0 0.0
        %1317 = vmatpush1.msra.mxu0 %v1261
        %1318 = vmatprep.subr.mxu0 0.0
        %1319 = vmatpush1.msra.mxu0 %v1262
        %1320 = vmatprep.subr.mxu0 0.0
        %1321 = vmatpush1.msra.mxu0 %v1263
        %1322 = vmatprep.subr.mxu0 0.0
        %1323 = vmatpush1.msra.mxu0 %v1264
        %1324 = vmatprep.subr.mxu0 0.0
        %1325 = vmatpush1.msra.mxu0 %v1265
        %1326 = vmatprep.subr.mxu0 0.0
        %1327 = vmatpush1.msra.mxu0 %v1266
        %1328 = vmatprep.subr.mxu0 0.0
        %1329 = vmatpush1.msra.mxu0 %v1267
        %1330 = vmatprep.subr.mxu0 0.0
        %1331 = vmatpush1.msra.mxu0 %v1268
        %1332 = vmatprep.subr.mxu0 0.0
        %1333 = vmatpush1.msra.mxu0 %v1269
        %1334 = vmatprep.mubr.f32.mxu0 %v1235
        %1335 = vmatmul.mubr.f32.gmra.mrb[0].mxu0 %v1234
        %v1336 = vpop.f32.mrb[0].mxu0
        %v1337 = vadd.f32 0.0, %v1336
        %v1338 = vpop.f32.mrb[0].mxu0
        %1339 = vmatprep.mubr.f32.mxu0 %v1237
        %1340 = vmatmul.mubr.f32.gmra.mrb[0].mxu0 %v1236
        %v1341 = vpop.f32.mrb[0].mxu0
        %v1342 = vadd.f32 0.0, %v1341
        %v1343 = vpop.f32.mrb[0].mxu0
        %1344 = vdwg.mxu0
        %1347 = vrot.lane.b32.xlu0 %v1337, 96
        %v1348 = vpop.permute.xlu0 %1347
        %1349 = vrot.lane.b32.xlu0 %v1342, 96
        %v1350 = vpop.permute.xlu0 %1349
        %vm1353 = vcmask 1048320
        %1354 = vst.msk [vmem:[%s262] sm:$0xff] %vm1353, %v1348
        %1355 = vst.msk [vmem:[%s262 + $0x10] sm:$0xff] %vm1353, %v1350
        %s1356 = scalar_lea.vmem [#allocation2], 512
        %v1357 = vld [vmem:[%s1356] sm:$0xff]
        %v1358 = vld [vmem:[%s1356 + $0x8] sm:$0xff]
        %v1359 = vld [vmem:[%s1356 + $0x10] sm:$0xff]
        %v1360 = vld [vmem:[%s1356 + $0x18] sm:$0xff]
        %v1361 = vld [vmem:[%s1356 + $0x20] sm:$0xff]
        %v1362 = vld [vmem:[%s1356 + $0x28] sm:$0xff]
        %v1363 = vld [vmem:[%s1356 + $0x30] sm:$0xff]
        %v1364 = vld [vmem:[%s1356 + $0x38] sm:$0xff]
        %v1365 = vld [vmem:[%s1356 + $0x40] sm:$0xff]
        %v1366 = vld [vmem:[%s1356 + $0x48] sm:$0xff]
        %v1367 = vld [vmem:[%s1356 + $0x50] sm:$0xff]
        %v1368 = vld [vmem:[%s1356 + $0x58] sm:$0xff]
        %v1369 = vld [vmem:[%s1356 + $0x60] sm:$0xff]
        %v1370 = vld [vmem:[%s1356 + $0x68] sm:$0xff]
        %v1371 = vld [vmem:[%s1356 + $0x70] sm:$0xff]
        %v1372 = vld [vmem:[%s1356 + $0x78] sm:$0xff]
        %1373 = vmatprep.subr.mxu0 %v1358
        %1374 = vmatpush1.msra.mxu0 %v1357
        %1375 = vmatprep.subr.mxu0 %v1360
        %1376 = vmatpush1.msra.mxu0 %v1359
        %1377 = vmatprep.subr.mxu0 %v1362
        %1378 = vmatpush1.msra.mxu0 %v1361
        %1379 = vmatprep.subr.mxu0 %v1364
        %1380 = vmatpush1.msra.mxu0 %v1363
        %1381 = vmatprep.subr.mxu0 %v1366
        %1382 = vmatpush1.msra.mxu0 %v1365
        %1383 = vmatprep.subr.mxu0 %v1368
        %1384 = vmatpush1.msra.mxu0 %v1367
        %1385 = vmatprep.subr.mxu0 %v1370
        %1386 = vmatpush1.msra.mxu0 %v1369
        %1387 = vmatprep.subr.mxu0 %v1372
        %1388 = vmatpush1.msra.mxu0 %v1371
        %1389 = vmatprep.subr.mxu0 0.0
        %1390 = vmatpush1.msra.mxu0 0.0
        %1391 = vmatprep.subr.mxu0 0.0
        %1392 = vmatpush1.msra.mxu0 0.0
        %1393 = vmatprep.subr.mxu0 0.0
        %1394 = vmatpush1.msra.mxu0 0.0
        %1395 = vmatprep.subr.mxu0 0.0
        %1396 = vmatpush1.msra.mxu0 0.0
        %1397 = vmatprep.subr.mxu0 0.0
        %1398 = vmatpush1.msra.mxu0 0.0
        %1399 = vmatprep.subr.mxu0 0.0
        %1400 = vmatpush1.msra.mxu0 0.0
        %1401 = vmatprep.subr.mxu0 0.0
        %1402 = vmatpush1.msra.mxu0 0.0
        %1403 = vmatprep.subr.mxu0 0.0
        %1404 = vmatpush1.msra.mxu0 0.0
        %1405 = vmatprep.subr.mxu0 0.0
        %1406 = vmatpush1.msra.mxu0 0.0
        %1407 = vmatprep.subr.mxu0 0.0
        %1408 = vmatpush1.msra.mxu0 0.0
        %1409 = vmatprep.subr.mxu0 0.0
        %1410 = vmatpush1.msra.mxu0 0.0
        %1411 = vmatprep.subr.mxu0 0.0
        %1412 = vmatpush1.msra.mxu0 0.0
        %1413 = vmatprep.subr.mxu0 0.0
        %1414 = vmatpush1.msra.mxu0 0.0
        %1415 = vmatprep.subr.mxu0 0.0
        %1416 = vmatpush1.msra.mxu0 0.0
        %1417 = vmatprep.subr.mxu0 0.0
        %1418 = vmatpush1.msra.mxu0 0.0
        %1419 = vmatprep.subr.mxu0 0.0
        %1420 = vmatpush1.msra.mxu0 0.0
        %1421 = vmatprep.subr.mxu0 0.0
        %1422 = vmatpush1.msra.mxu0 0.0
        %1423 = vmatprep.subr.mxu0 0.0
        %1424 = vmatpush1.msra.mxu0 0.0
        %1425 = vmatprep.subr.mxu0 0.0
        %1426 = vmatpush1.msra.mxu0 0.0
        %1427 = vmatprep.subr.mxu0 0.0
        %1428 = vmatpush1.msra.mxu0 0.0
        %1429 = vmatprep.subr.mxu0 0.0
        %1430 = vmatpush1.msra.mxu0 0.0
        %1431 = vmatprep.subr.mxu0 0.0
        %1432 = vmatpush1.msra.mxu0 0.0
        %1433 = vmatprep.subr.mxu0 0.0
        %1434 = vmatpush1.msra.mxu0 0.0
        %1435 = vmatprep.subr.mxu0 0.0
        %1436 = vmatpush1.msra.mxu0 0.0
        %1437 = vmatprep.mubr.f32.mxu0 0.0
        %1438 = vmatmul.mubr.f32.gmra.mrb[0].mxu0 %v512
        %v1439 = vpop.f32.mrb[0].mxu0
        %v1440 = vadd.f32 0.0, %v1439
        %v1441 = vpop.f32.mrb[0].mxu0
        %v1442 = vadd.f32 0.0, %v1441
        %1443 = vmatprep.mubr.f32.mxu0 0.0
        %1444 = vmatmul.mubr.f32.gmra.mrb[0].mxu0 %v515
        %v1445 = vpop.f32.mrb[0].mxu0
        %v1446 = vadd.f32 0.0, %v1445
        %v1447 = vpop.f32.mrb[0].mxu0
        %v1448 = vadd.f32 0.0, %v1447
        %1449 = vdwg.mxu0
        %v1450 = vmul.f32 %v1440, %v271
        %v1451 = vmul.f32 %v1442, %v272
        %v1452 = vmul.f32 %v1446, %v273
        %v1453 = vmul.f32 %v1448, %v274
        %v1454 = vld [vmem:[%s5] sm:$0xff]
        %v1455 = vld [vmem:[%s5 + $0x8] sm:$0xff]
        %v1456 = vld [vmem:[%s5 + $0x10] sm:$0xff]
        %v1457 = vld [vmem:[%s5 + $0x18] sm:$0xff]
        %v1458 = vld [vmem:[%s5 + $0x20] sm:$0xff]
        %v1459 = vld [vmem:[%s5 + $0x28] sm:$0xff]
        %v1460 = vld [vmem:[%s5 + $0x30] sm:$0xff]
        %v1461 = vld [vmem:[%s5 + $0x38] sm:$0xff]
        %v1462 = vld [vmem:[%s5 + $0x40] sm:$0xff]
        %v1463 = vld [vmem:[%s5 + $0x48] sm:$0xff]
        %v1464 = vld [vmem:[%s5 + $0x50] sm:$0xff]
        %v1465 = vld [vmem:[%s5 + $0x58] sm:$0xff]
        %v1466 = vld [vmem:[%s5 + $0x60] sm:$0xff]
        %v1467 = vld [vmem:[%s5 + $0x68] sm:$0xff]
        %v1468 = vld [vmem:[%s5 + $0x70] sm:$0xff]
        %v1469 = vld [vmem:[%s5 + $0x78] sm:$0xff]
        %v1470 = vld [vmem:[%s5 + $0x80] sm:$0xff]
        %v1471 = vld [vmem:[%s5 + $0x88] sm:$0xff]
        %v1472 = vld [vmem:[%s5 + $0x90] sm:$0xff]
        %v1473 = vld [vmem:[%s5 + $0x98] sm:$0xff]
        %v1474 = vld [vmem:[%s5 + $0xa0] sm:$0xff]
        %v1475 = vld [vmem:[%s5 + $0xa8] sm:$0xff]
        %v1476 = vld [vmem:[%s5 + $0xb0] sm:$0xff]
        %v1477 = vld [vmem:[%s5 + $0xb8] sm:$0xff]
        %v1478 = vld [vmem:[%s5 + $0xc0] sm:$0xff]
        %v1479 = vld [vmem:[%s5 + $0xc8] sm:$0xff]
        %v1480 = vld [vmem:[%s5 + $0xd0] sm:$0xff]
        %v1481 = vld [vmem:[%s5 + $0xd8] sm:$0xff]
        %v1482 = vld [vmem:[%s5 + $0xe0] sm:$0xff]
        %v1483 = vld [vmem:[%s5 + $0xe8] sm:$0xff]
        %v1484 = vld [vmem:[%s5 + $0xf0] sm:$0xff]
        %v1485 = vld [vmem:[%s5 + $0xf8] sm:$0xff]
        %1486 = vmatprep.subr.mxu0 0.0
        %1487 = vmatpush1.msra.mxu0 %v1454
        %1488 = vmatprep.subr.mxu0 0.0
        %1489 = vmatpush1.msra.mxu0 %v1455
        %1490 = vmatprep.subr.mxu0 0.0
        %1491 = vmatpush1.msra.mxu0 %v1456
        %1492 = vmatprep.subr.mxu0 0.0
        %1493 = vmatpush1.msra.mxu0 %v1457
        %1494 = vmatprep.subr.mxu0 0.0
        %1495 = vmatpush1.msra.mxu0 %v1458
        %1496 = vmatprep.subr.mxu0 0.0
        %1497 = vmatpush1.msra.mxu0 %v1459
        %1498 = vmatprep.subr.mxu0 0.0
        %1499 = vmatpush1.msra.mxu0 %v1460
        %1500 = vmatprep.subr.mxu0 0.0
        %1501 = vmatpush1.msra.mxu0 %v1461
        %1502 = vmatprep.subr.mxu0 0.0
        %1503 = vmatpush1.msra.mxu0 %v1462
        %1504 = vmatprep.subr.mxu0 0.0
        %1505 = vmatpush1.msra.mxu0 %v1463
        %1506 = vmatprep.subr.mxu0 0.0
        %1507 = vmatpush1.msra.mxu0 %v1464
        %1508 = vmatprep.subr.mxu0 0.0
        %1509 = vmatpush1.msra.mxu0 %v1465
        %1510 = vmatprep.subr.mxu0 0.0
        %1511 = vmatpush1.msra.mxu0 %v1466
        %1512 = vmatprep.subr.mxu0 0.0
        %1513 = vmatpush1.msra.mxu0 %v1467
        %1514 = vmatprep.subr.mxu0 0.0
        %1515 = vmatpush1.msra.mxu0 %v1468
        %1516 = vmatprep.subr.mxu0 0.0
        %1517 = vmatpush1.msra.mxu0 %v1469
        %1518 = vmatprep.subr.mxu0 0.0
        %1519 = vmatpush1.msra.mxu0 %v1470
        %1520 = vmatprep.subr.mxu0 0.0
        %1521 = vmatpush1.msra.mxu0 %v1471
        %1522 = vmatprep.subr.mxu0 0.0
        %1523 = vmatpush1.msra.mxu0 %v1472
        %1524 = vmatprep.subr.mxu0 0.0
        %1525 = vmatpush1.msra.mxu0 %v1473
        %1526 = vmatprep.subr.mxu0 0.0
        %1527 = vmatpush1.msra.mxu0 %v1474
        %1528 = vmatprep.subr.mxu0 0.0
        %1529 = vmatpush1.msra.mxu0 %v1475
        %1530 = vmatprep.subr.mxu0 0.0
        %1531 = vmatpush1.msra.mxu0 %v1476
        %1532 = vmatprep.subr.mxu0 0.0
        %1533 = vmatpush1.msra.mxu0 %v1477
        %1534 = vmatprep.subr.mxu0 0.0
        %1535 = vmatpush1.msra.mxu0 %v1478
        %1536 = vmatprep.subr.mxu0 0.0
        %1537 = vmatpush1.msra.mxu0 %v1479
        %1538 = vmatprep.subr.mxu0 0.0
        %1539 = vmatpush1.msra.mxu0 %v1480
        %1540 = vmatprep.subr.mxu0 0.0
        %1541 = vmatpush1.msra.mxu0 %v1481
        %1542 = vmatprep.subr.mxu0 0.0
        %1543 = vmatpush1.msra.mxu0 %v1482
        %1544 = vmatprep.subr.mxu0 0.0
        %1545 = vmatpush1.msra.mxu0 %v1483
        %1546 = vmatprep.subr.mxu0 0.0
        %1547 = vmatpush1.msra.mxu0 %v1484
        %1548 = vmatprep.subr.mxu0 0.0
        %1549 = vmatpush1.msra.mxu0 %v1485
        %1550 = vmatprep.mubr.f32.mxu0 %v1451
        %1551 = vmatmul.mubr.f32.gmra.mrb[0].mxu0 %v1450
        %v1552 = vpop.f32.mrb[0].mxu0
        %v1553 = vadd.f32 0.0, %v1552
        %v1554 = vpop.f32.mrb[0].mxu0
        %1555 = vmatprep.mubr.f32.mxu0 %v1453
        %1556 = vmatmul.mubr.f32.gmra.mrb[0].mxu0 %v1452
        %v1557 = vpop.f32.mrb[0].mxu0
        %v1558 = vadd.f32 0.0, %v1557
        %v1559 = vpop.f32.mrb[0].mxu0
        %1560 = vdwg.mxu0
        %1561 = vst.msk [vmem:[%s262 + $0x8] sm:$0xff] %vm705, %v1553
        %1562 = vst.msk [vmem:[%s262 + $0x18] sm:$0xff] %vm705, %v1558
        %s1563 = scalar_lea.vmem [#allocation2], 640
        %v1564 = vld [vmem:[%s1563] sm:$0xff]
        %v1565 = vld [vmem:[%s1563 + $0x8] sm:$0xff]
        %v1566 = vld [vmem:[%s1563 + $0x10] sm:$0xff]
        %v1567 = vld [vmem:[%s1563 + $0x18] sm:$0xff]
        %v1568 = vld [vmem:[%s1563 + $0x20] sm:$0xff]
        %v1569 = vld [vmem:[%s1563 + $0x28] sm:$0xff]
        %v1570 = vld [vmem:[%s1563 + $0x30] sm:$0xff]
        %v1571 = vld [vmem:[%s1563 + $0x38] sm:$0xff]
        %v1572 = vld [vmem:[%s1563 + $0x40] sm:$0xff]
        %v1573 = vld [vmem:[%s1563 + $0x48] sm:$0xff]
        %v1574 = vld [vmem:[%s1563 + $0x50] sm:$0xff]
        %v1575 = vld [vmem:[%s1563 + $0x58] sm:$0xff]
        %v1576 = vld [vmem:[%s1563 + $0x60] sm:$0xff]
        %v1577 = vld [vmem:[%s1563 + $0x68] sm:$0xff]
        %v1578 = vld [vmem:[%s1563 + $0x70] sm:$0xff]
        %v1579 = vld [vmem:[%s1563 + $0x78] sm:$0xff]
        %1580 = vmatprep.subr.mxu0 %v1565
        %1581 = vmatpush1.msra.mxu0 %v1564
        %1582 = vmatprep.subr.mxu0 %v1567
        %1583 = vmatpush1.msra.mxu0 %v1566
        %1584 = vmatprep.subr.mxu0 %v1569
        %1585 = vmatpush1.msra.mxu0 %v1568
        %1586 = vmatprep.subr.mxu0 %v1571
        %1587 = vmatpush1.msra.mxu0 %v1570
        %1588 = vmatprep.subr.mxu0 %v1573
        %1589 = vmatpush1.msra.mxu0 %v1572
        %1590 = vmatprep.subr.mxu0 %v1575
        %1591 = vmatpush1.msra.mxu0 %v1574
        %1592 = vmatprep.subr.mxu0 %v1577
        %1593 = vmatpush1.msra.mxu0 %v1576
        %1594 = vmatprep.subr.mxu0 %v1579
        %1595 = vmatpush1.msra.mxu0 %v1578
        %1596 = vmatprep.subr.mxu0 0.0
        %1597 = vmatpush1.msra.mxu0 0.0
        %1598 = vmatprep.subr.mxu0 0.0
        %1599 = vmatpush1.msra.mxu0 0.0
        %1600 = vmatprep.subr.mxu0 0.0
        %1601 = vmatpush1.msra.mxu0 0.0
        %1602 = vmatprep.subr.mxu0 0.0
        %1603 = vmatpush1.msra.mxu0 0.0
        %1604 = vmatprep.subr.mxu0 0.0
        %1605 = vmatpush1.msra.mxu0 0.0
        %1606 = vmatprep.subr.mxu0 0.0
        %1607 = vmatpush1.msra.mxu0 0.0
        %1608 = vmatprep.subr.mxu0 0.0
        %1609 = vmatpush1.msra.mxu0 0.0
        %1610 = vmatprep.subr.mxu0 0.0
        %1611 = vmatpush1.msra.mxu0 0.0
        %1612 = vmatprep.subr.mxu0 0.0
        %1613 = vmatpush1.msra.mxu0 0.0
        %1614 = vmatprep.subr.mxu0 0.0
        %1615 = vmatpush1.msra.mxu0 0.0
        %1616 = vmatprep.subr.mxu0 0.0
        %1617 = vmatpush1.msra.mxu0 0.0
        %1618 = vmatprep.subr.mxu0 0.0
        %1619 = vmatpush1.msra.mxu0 0.0
        %1620 = vmatprep.subr.mxu0 0.0
        %1621 = vmatpush1.msra.mxu0 0.0
        %1622 = vmatprep.subr.mxu0 0.0
        %1623 = vmatpush1.msra.mxu0 0.0
        %1624 = vmatprep.subr.mxu0 0.0
        %1625 = vmatpush1.msra.mxu0 0.0
        %1626 = vmatprep.subr.mxu0 0.0
        %1627 = vmatpush1.msra.mxu0 0.0
        %1628 = vmatprep.subr.mxu0 0.0
        %1629 = vmatpush1.msra.mxu0 0.0
        %1630 = vmatprep.subr.mxu0 0.0
        %1631 = vmatpush1.msra.mxu0 0.0
        %1632 = vmatprep.subr.mxu0 0.0
        %1633 = vmatpush1.msra.mxu0 0.0
        %1634 = vmatprep.subr.mxu0 0.0
        %1635 = vmatpush1.msra.mxu0 0.0
        %1636 = vmatprep.subr.mxu0 0.0
        %1637 = vmatpush1.msra.mxu0 0.0
        %1638 = vmatprep.subr.mxu0 0.0
        %1639 = vmatpush1.msra.mxu0 0.0
        %1640 = vmatprep.subr.mxu0 0.0
        %1641 = vmatpush1.msra.mxu0 0.0
        %1642 = vmatprep.subr.mxu0 0.0
        %1643 = vmatpush1.msra.mxu0 0.0
        %1644 = vmatprep.mubr.f32.mxu0 0.0
        %1645 = vmatmul.mubr.f32.gmra.mrb[0].mxu0 %v512
        %v1646 = vpop.f32.mrb[0].mxu0
        %v1647 = vadd.f32 0.0, %v1646
        %v1648 = vpop.f32.mrb[0].mxu0
        %v1649 = vadd.f32 0.0, %v1648
        %1650 = vmatprep.mubr.f32.mxu0 0.0
        %1651 = vmatmul.mubr.f32.gmra.mrb[0].mxu0 %v515
        %v1652 = vpop.f32.mrb[0].mxu0
        %v1653 = vadd.f32 0.0, %v1652
        %v1654 = vpop.f32.mrb[0].mxu0
        %v1655 = vadd.f32 0.0, %v1654
        %1656 = vdwg.mxu0
        %v1657 = vmul.f32 %v1647, %v271
        %v1658 = vmul.f32 %v1649, %v272
        %v1659 = vmul.f32 %v1653, %v273
        %v1660 = vmul.f32 %v1655, %v274
        %v1661 = vld [vmem:[%s5] sm:$0xff]
        %v1662 = vld [vmem:[%s5 + $0x8] sm:$0xff]
        %v1663 = vld [vmem:[%s5 + $0x10] sm:$0xff]
        %v1664 = vld [vmem:[%s5 + $0x18] sm:$0xff]
        %v1665 = vld [vmem:[%s5 + $0x20] sm:$0xff]
        %v1666 = vld [vmem:[%s5 + $0x28] sm:$0xff]
        %v1667 = vld [vmem:[%s5 + $0x30] sm:$0xff]
        %v1668 = vld [vmem:[%s5 + $0x38] sm:$0xff]
        %v1669 = vld [vmem:[%s5 + $0x40] sm:$0xff]
        %v1670 = vld [vmem:[%s5 + $0x48] sm:$0xff]
        %v1671 = vld [vmem:[%s5 + $0x50] sm:$0xff]
        %v1672 = vld [vmem:[%s5 + $0x58] sm:$0xff]
        %v1673 = vld [vmem:[%s5 + $0x60] sm:$0xff]
        %v1674 = vld [vmem:[%s5 + $0x68] sm:$0xff]
        %v1675 = vld [vmem:[%s5 + $0x70] sm:$0xff]
        %v1676 = vld [vmem:[%s5 + $0x78] sm:$0xff]
        %v1677 = vld [vmem:[%s5 + $0x80] sm:$0xff]
        %v1678 = vld [vmem:[%s5 + $0x88] sm:$0xff]
        %v1679 = vld [vmem:[%s5 + $0x90] sm:$0xff]
        %v1680 = vld [vmem:[%s5 + $0x98] sm:$0xff]
        %v1681 = vld [vmem:[%s5 + $0xa0] sm:$0xff]
        %v1682 = vld [vmem:[%s5 + $0xa8] sm:$0xff]
        %v1683 = vld [vmem:[%s5 + $0xb0] sm:$0xff]
        %v1684 = vld [vmem:[%s5 + $0xb8] sm:$0xff]
        %v1685 = vld [vmem:[%s5 + $0xc0] sm:$0xff]
        %v1686 = vld [vmem:[%s5 + $0xc8] sm:$0xff]
        %v1687 = vld [vmem:[%s5 + $0xd0] sm:$0xff]
        %v1688 = vld [vmem:[%s5 + $0xd8] sm:$0xff]
        %v1689 = vld [vmem:[%s5 + $0xe0] sm:$0xff]
        %v1690 = vld [vmem:[%s5 + $0xe8] sm:$0xff]
        %v1691 = vld [vmem:[%s5 + $0xf0] sm:$0xff]
        %v1692 = vld [vmem:[%s5 + $0xf8] sm:$0xff]
        %1693 = vmatprep.subr.mxu0 0.0
        %1694 = vmatpush1.msra.mxu0 %v1661
        %1695 = vmatprep.subr.mxu0 0.0
        %1696 = vmatpush1.msra.mxu0 %v1662
        %1697 = vmatprep.subr.mxu0 0.0
        %1698 = vmatpush1.msra.mxu0 %v1663
        %1699 = vmatprep.subr.mxu0 0.0
        %1700 = vmatpush1.msra.mxu0 %v1664
        %1701 = vmatprep.subr.mxu0 0.0
        %1702 = vmatpush1.msra.mxu0 %v1665
        %1703 = vmatprep.subr.mxu0 0.0
        %1704 = vmatpush1.msra.mxu0 %v1666
        %1705 = vmatprep.subr.mxu0 0.0
        %1706 = vmatpush1.msra.mxu0 %v1667
        %1707 = vmatprep.subr.mxu0 0.0
        %1708 = vmatpush1.msra.mxu0 %v1668
        %1709 = vmatprep.subr.mxu0 0.0
        %1710 = vmatpush1.msra.mxu0 %v1669
        %1711 = vmatprep.subr.mxu0 0.0
        %1712 = vmatpush1.msra.mxu0 %v1670
        %1713 = vmatprep.subr.mxu0 0.0
        %1714 = vmatpush1.msra.mxu0 %v1671
        %1715 = vmatprep.subr.mxu0 0.0
        %1716 = vmatpush1.msra.mxu0 %v1672
        %1717 = vmatprep.subr.mxu0 0.0
        %1718 = vmatpush1.msra.mxu0 %v1673
        %1719 = vmatprep.subr.mxu0 0.0
        %1720 = vmatpush1.msra.mxu0 %v1674
        %1721 = vmatprep.subr.mxu0 0.0
        %1722 = vmatpush1.msra.mxu0 %v1675
        %1723 = vmatprep.subr.mxu0 0.0
        %1724 = vmatpush1.msra.mxu0 %v1676
        %1725 = vmatprep.subr.mxu0 0.0
        %1726 = vmatpush1.msra.mxu0 %v1677
        %1727 = vmatprep.subr.mxu0 0.0
        %1728 = vmatpush1.msra.mxu0 %v1678
        %1729 = vmatprep.subr.mxu0 0.0
        %1730 = vmatpush1.msra.mxu0 %v1679
        %1731 = vmatprep.subr.mxu0 0.0
        %1732 = vmatpush1.msra.mxu0 %v1680
        %1733 = vmatprep.subr.mxu0 0.0
        %1734 = vmatpush1.msra.mxu0 %v1681
        %1735 = vmatprep.subr.mxu0 0.0
        %1736 = vmatpush1.msra.mxu0 %v1682
        %1737 = vmatprep.subr.mxu0 0.0
        %1738 = vmatpush1.msra.mxu0 %v1683
        %1739 = vmatprep.subr.mxu0 0.0
        %1740 = vmatpush1.msra.mxu0 %v1684
        %1741 = vmatprep.subr.mxu0 0.0
        %1742 = vmatpush1.msra.mxu0 %v1685
        %1743 = vmatprep.subr.mxu0 0.0
        %1744 = vmatpush1.msra.mxu0 %v1686
        %1745 = vmatprep.subr.mxu0 0.0
        %1746 = vmatpush1.msra.mxu0 %v1687
        %1747 = vmatprep.subr.mxu0 0.0
        %1748 = vmatpush1.msra.mxu0 %v1688
        %1749 = vmatprep.subr.mxu0 0.0
        %1750 = vmatpush1.msra.mxu0 %v1689
        %1751 = vmatprep.subr.mxu0 0.0
        %1752 = vmatpush1.msra.mxu0 %v1690
        %1753 = vmatprep.subr.mxu0 0.0
        %1754 = vmatpush1.msra.mxu0 %v1691
        %1755 = vmatprep.subr.mxu0 0.0
        %1756 = vmatpush1.msra.mxu0 %v1692
        %1757 = vmatprep.mubr.f32.mxu0 %v1658
        %1758 = vmatmul.mubr.f32.gmra.mrb[0].mxu0 %v1657
        %v1759 = vpop.f32.mrb[0].mxu0
        %v1760 = vadd.f32 0.0, %v1759
        %v1761 = vpop.f32.mrb[0].mxu0
        %1762 = vmatprep.mubr.f32.mxu0 %v1660
        %1763 = vmatmul.mubr.f32.gmra.mrb[0].mxu0 %v1659
        %v1764 = vpop.f32.mrb[0].mxu0
        %v1765 = vadd.f32 0.0, %v1764
        %v1766 = vpop.f32.mrb[0].mxu0
        %1767 = vdwg.mxu0
        %1770 = vrot.lane.b32.xlu0 %v1760, 32
        %v1771 = vpop.permute.xlu0 %1770
        %1772 = vrot.lane.b32.xlu0 %v1765, 32
        %v1773 = vpop.permute.xlu0 %1772
        %1776 = vst.msk [vmem:[%s262 + $0x8] sm:$0xff] %vm921, %v1771
        %1777 = vst.msk [vmem:[%s262 + $0x18] sm:$0xff] %vm921, %v1773
        %s1778 = scalar_lea.vmem [#allocation2], 768
        %v1779 = vld [vmem:[%s1778] sm:$0xff]
        %v1780 = vld [vmem:[%s1778 + $0x8] sm:$0xff]
        %v1781 = vld [vmem:[%s1778 + $0x10] sm:$0xff]
        %v1782 = vld [vmem:[%s1778 + $0x18] sm:$0xff]
        %v1783 = vld [vmem:[%s1778 + $0x20] sm:$0xff]
        %v1784 = vld [vmem:[%s1778 + $0x28] sm:$0xff]
        %v1785 = vld [vmem:[%s1778 + $0x30] sm:$0xff]
        %v1786 = vld [vmem:[%s1778 + $0x38] sm:$0xff]
        %v1787 = vld [vmem:[%s1778 + $0x40] sm:$0xff]
        %v1788 = vld [vmem:[%s1778 + $0x48] sm:$0xff]
        %v1789 = vld [vmem:[%s1778 + $0x50] sm:$0xff]
        %v1790 = vld [vmem:[%s1778 + $0x58] sm:$0xff]
        %v1791 = vld [vmem:[%s1778 + $0x60] sm:$0xff]
        %v1792 = vld [vmem:[%s1778 + $0x68] sm:$0xff]
        %v1793 = vld [vmem:[%s1778 + $0x70] sm:$0xff]
        %v1794 = vld [vmem:[%s1778 + $0x78] sm:$0xff]
        %1795 = vmatprep.subr.mxu0 %v1780
        %1796 = vmatpush1.msra.mxu0 %v1779
        %1797 = vmatprep.subr.mxu0 %v1782
        %1798 = vmatpush1.msra.mxu0 %v1781
        %1799 = vmatprep.subr.mxu0 %v1784
        %1800 = vmatpush1.msra.mxu0 %v1783
        %1801 = vmatprep.subr.mxu0 %v1786
        %1802 = vmatpush1.msra.mxu0 %v1785
        %1803 = vmatprep.subr.mxu0 %v1788
        %1804 = vmatpush1.msra.mxu0 %v1787
        %1805 = vmatprep.subr.mxu0 %v1790
        %1806 = vmatpush1.msra.mxu0 %v1789
        %1807 = vmatprep.subr.mxu0 %v1792
        %1808 = vmatpush1.msra.mxu0 %v1791
        %1809 = vmatprep.subr.mxu0 %v1794
        %1810 = vmatpush1.msra.mxu0 %v1793
        %1811 = vmatprep.subr.mxu0 0.0
        %1812 = vmatpush1.msra.mxu0 0.0
        %1813 = vmatprep.subr.mxu0 0.0
        %1814 = vmatpush1.msra.mxu0 0.0
        %1815 = vmatprep.subr.mxu0 0.0
        %1816 = vmatpush1.msra.mxu0 0.0
        %1817 = vmatprep.subr.mxu0 0.0
        %1818 = vmatpush1.msra.mxu0 0.0
        %1819 = vmatprep.subr.mxu0 0.0
        %1820 = vmatpush1.msra.mxu0 0.0
        %1821 = vmatprep.subr.mxu0 0.0
        %1822 = vmatpush1.msra.mxu0 0.0
        %1823 = vmatprep.subr.mxu0 0.0
        %1824 = vmatpush1.msra.mxu0 0.0
        %1825 = vmatprep.subr.mxu0 0.0
        %1826 = vmatpush1.msra.mxu0 0.0
        %1827 = vmatprep.subr.mxu0 0.0
        %1828 = vmatpush1.msra.mxu0 0.0
        %1829 = vmatprep.subr.mxu0 0.0
        %1830 = vmatpush1.msra.mxu0 0.0
        %1831 = vmatprep.subr.mxu0 0.0
        %1832 = vmatpush1.msra.mxu0 0.0
        %1833 = vmatprep.subr.mxu0 0.0
        %1834 = vmatpush1.msra.mxu0 0.0
        %1835 = vmatprep.subr.mxu0 0.0
        %1836 = vmatpush1.msra.mxu0 0.0
        %1837 = vmatprep.subr.mxu0 0.0
        %1838 = vmatpush1.msra.mxu0 0.0
        %1839 = vmatprep.subr.mxu0 0.0
        %1840 = vmatpush1.msra.mxu0 0.0
        %1841 = vmatprep.subr.mxu0 0.0
        %1842 = vmatpush1.msra.mxu0 0.0
        %1843 = vmatprep.subr.mxu0 0.0
        %1844 = vmatpush1.msra.mxu0 0.0
        %1845 = vmatprep.subr.mxu0 0.0
        %1846 = vmatpush1.msra.mxu0 0.0
        %1847 = vmatprep.subr.mxu0 0.0
        %1848 = vmatpush1.msra.mxu0 0.0
        %1849 = vmatprep.subr.mxu0 0.0
        %1850 = vmatpush1.msra.mxu0 0.0
        %1851 = vmatprep.subr.mxu0 0.0
        %1852 = vmatpush1.msra.mxu0 0.0
        %1853 = vmatprep.subr.mxu0 0.0
        %1854 = vmatpush1.msra.mxu0 0.0
        %1855 = vmatprep.subr.mxu0 0.0
        %1856 = vmatpush1.msra.mxu0 0.0
        %1857 = vmatprep.subr.mxu0 0.0
        %1858 = vmatpush1.msra.mxu0 0.0
        %1859 = vmatprep.mubr.f32.mxu0 0.0
        %1860 = vmatmul.mubr.f32.gmra.mrb[0].mxu0 %v512
        %v1861 = vpop.f32.mrb[0].mxu0
        %v1862 = vadd.f32 0.0, %v1861
        %v1863 = vpop.f32.mrb[0].mxu0
        %v1864 = vadd.f32 0.0, %v1863
        %1865 = vmatprep.mubr.f32.mxu0 0.0
        %1866 = vmatmul.mubr.f32.gmra.mrb[0].mxu0 %v515
        %v1867 = vpop.f32.mrb[0].mxu0
        %v1868 = vadd.f32 0.0, %v1867
        %v1869 = vpop.f32.mrb[0].mxu0
        %v1870 = vadd.f32 0.0, %v1869
        %1871 = vdwg.mxu0
        %v1872 = vmul.f32 %v1862, %v271
        %v1873 = vmul.f32 %v1864, %v272
        %v1874 = vmul.f32 %v1868, %v273
        %v1875 = vmul.f32 %v1870, %v274
        %v1876 = vld [vmem:[%s5] sm:$0xff]
        %v1877 = vld [vmem:[%s5 + $0x8] sm:$0xff]
        %v1878 = vld [vmem:[%s5 + $0x10] sm:$0xff]
        %v1879 = vld [vmem:[%s5 + $0x18] sm:$0xff]
        %v1880 = vld [vmem:[%s5 + $0x20] sm:$0xff]
        %v1881 = vld [vmem:[%s5 + $0x28] sm:$0xff]
        %v1882 = vld [vmem:[%s5 + $0x30] sm:$0xff]
        %v1883 = vld [vmem:[%s5 + $0x38] sm:$0xff]
        %v1884 = vld [vmem:[%s5 + $0x40] sm:$0xff]
        %v1885 = vld [vmem:[%s5 + $0x48] sm:$0xff]
        %v1886 = vld [vmem:[%s5 + $0x50] sm:$0xff]
        %v1887 = vld [vmem:[%s5 + $0x58] sm:$0xff]
        %v1888 = vld [vmem:[%s5 + $0x60] sm:$0xff]
        %v1889 = vld [vmem:[%s5 + $0x68] sm:$0xff]
        %v1890 = vld [vmem:[%s5 + $0x70] sm:$0xff]
        %v1891 = vld [vmem:[%s5 + $0x78] sm:$0xff]
        %v1892 = vld [vmem:[%s5 + $0x80] sm:$0xff]
        %v1893 = vld [vmem:[%s5 + $0x88] sm:$0xff]
        %v1894 = vld [vmem:[%s5 + $0x90] sm:$0xff]
        %v1895 = vld [vmem:[%s5 + $0x98] sm:$0xff]
        %v1896 = vld [vmem:[%s5 + $0xa0] sm:$0xff]
        %v1897 = vld [vmem:[%s5 + $0xa8] sm:$0xff]
        %v1898 = vld [vmem:[%s5 + $0xb0] sm:$0xff]
        %v1899 = vld [vmem:[%s5 + $0xb8] sm:$0xff]
        %v1900 = vld [vmem:[%s5 + $0xc0] sm:$0xff]
        %v1901 = vld [vmem:[%s5 + $0xc8] sm:$0xff]
        %v1902 = vld [vmem:[%s5 + $0xd0] sm:$0xff]
        %v1903 = vld [vmem:[%s5 + $0xd8] sm:$0xff]
        %v1904 = vld [vmem:[%s5 + $0xe0] sm:$0xff]
        %v1905 = vld [vmem:[%s5 + $0xe8] sm:$0xff]
        %v1906 = vld [vmem:[%s5 + $0xf0] sm:$0xff]
        %v1907 = vld [vmem:[%s5 + $0xf8] sm:$0xff]
        %1908 = vmatprep.subr.mxu0 0.0
        %1909 = vmatpush1.msra.mxu0 %v1876
        %1910 = vmatprep.subr.mxu0 0.0
        %1911 = vmatpush1.msra.mxu0 %v1877
        %1912 = vmatprep.subr.mxu0 0.0
        %1913 = vmatpush1.msra.mxu0 %v1878
        %1914 = vmatprep.subr.mxu0 0.0
        %1915 = vmatpush1.msra.mxu0 %v1879
        %1916 = vmatprep.subr.mxu0 0.0
        %1917 = vmatpush1.msra.mxu0 %v1880
        %1918 = vmatprep.subr.mxu0 0.0
        %1919 = vmatpush1.msra.mxu0 %v1881
        %1920 = vmatprep.subr.mxu0 0.0
        %1921 = vmatpush1.msra.mxu0 %v1882
        %1922 = vmatprep.subr.mxu0 0.0
        %1923 = vmatpush1.msra.mxu0 %v1883
        %1924 = vmatprep.subr.mxu0 0.0
        %1925 = vmatpush1.msra.mxu0 %v1884
        %1926 = vmatprep.subr.mxu0 0.0
        %1927 = vmatpush1.msra.mxu0 %v1885
        %1928 = vmatprep.subr.mxu0 0.0
        %1929 = vmatpush1.msra.mxu0 %v1886
        %1930 = vmatprep.subr.mxu0 0.0
        %1931 = vmatpush1.msra.mxu0 %v1887
        %1932 = vmatprep.subr.mxu0 0.0
        %1933 = vmatpush1.msra.mxu0 %v1888
        %1934 = vmatprep.subr.mxu0 0.0
        %1935 = vmatpush1.msra.mxu0 %v1889
        %1936 = vmatprep.subr.mxu0 0.0
        %1937 = vmatpush1.msra.mxu0 %v1890
        %1938 = vmatprep.subr.mxu0 0.0
        %1939 = vmatpush1.msra.mxu0 %v1891
        %1940 = vmatprep.subr.mxu0 0.0
        %1941 = vmatpush1.msra.mxu0 %v1892
        %1942 = vmatprep.subr.mxu0 0.0
        %1943 = vmatpush1.msra.mxu0 %v1893
        %1944 = vmatprep.subr.mxu0 0.0
        %1945 = vmatpush1.msra.mxu0 %v1894
        %1946 = vmatprep.subr.mxu0 0.0
        %1947 = vmatpush1.msra.mxu0 %v1895
        %1948 = vmatprep.subr.mxu0 0.0
        %1949 = vmatpush1.msra.mxu0 %v1896
        %1950 = vmatprep.subr.mxu0 0.0
        %1951 = vmatpush1.msra.mxu0 %v1897
        %1952 = vmatprep.subr.mxu0 0.0
        %1953 = vmatpush1.msra.mxu0 %v1898
        %1954 = vmatprep.subr.mxu0 0.0
        %1955 = vmatpush1.msra.mxu0 %v1899
        %1956 = vmatprep.subr.mxu0 0.0
        %1957 = vmatpush1.msra.mxu0 %v1900
        %1958 = vmatprep.subr.mxu0 0.0
        %1959 = vmatpush1.msra.mxu0 %v1901
        %1960 = vmatprep.subr.mxu0 0.0
        %1961 = vmatpush1.msra.mxu0 %v1902
        %1962 = vmatprep.subr.mxu0 0.0
        %1963 = vmatpush1.msra.mxu0 %v1903
        %1964 = vmatprep.subr.mxu0 0.0
        %1965 = vmatpush1.msra.mxu0 %v1904
        %1966 = vmatprep.subr.mxu0 0.0
        %1967 = vmatpush1.msra.mxu0 %v1905
        %1968 = vmatprep.subr.mxu0 0.0
        %1969 = vmatpush1.msra.mxu0 %v1906
        %1970 = vmatprep.subr.mxu0 0.0
        %1971 = vmatpush1.msra.mxu0 %v1907
        %1972 = vmatprep.mubr.f32.mxu0 %v1873
        %1973 = vmatmul.mubr.f32.gmra.mrb[0].mxu0 %v1872
        %v1974 = vpop.f32.mrb[0].mxu0
        %v1975 = vadd.f32 0.0, %v1974
        %v1976 = vpop.f32.mrb[0].mxu0
        %1977 = vmatprep.mubr.f32.mxu0 %v1875
        %1978 = vmatmul.mubr.f32.gmra.mrb[0].mxu0 %v1874
        %v1979 = vpop.f32.mrb[0].mxu0
        %v1980 = vadd.f32 0.0, %v1979
        %v1981 = vpop.f32.mrb[0].mxu0
        %1982 = vdwg.mxu0
        %1985 = vrot.lane.b32.xlu0 %v1975, 64
        %v1986 = vpop.permute.xlu0 %1985
        %1987 = vrot.lane.b32.xlu0 %v1980, 64
        %v1988 = vpop.permute.xlu0 %1987
        %1991 = vst.msk [vmem:[%s262 + $0x8] sm:$0xff] %vm1137, %v1986
        %1992 = vst.msk [vmem:[%s262 + $0x18] sm:$0xff] %vm1137, %v1988
        %s1993 = scalar_lea.vmem [#allocation2], 896
        %v1994 = vld [vmem:[%s1993] sm:$0xff]
        %v1995 = vld [vmem:[%s1993 + $0x8] sm:$0xff]
        %v1996 = vld [vmem:[%s1993 + $0x10] sm:$0xff]
        %v1997 = vld [vmem:[%s1993 + $0x18] sm:$0xff]
        %v1998 = vld [vmem:[%s1993 + $0x20] sm:$0xff]
        %v1999 = vld [vmem:[%s1993 + $0x28] sm:$0xff]
        %v2000 = vld [vmem:[%s1993 + $0x30] sm:$0xff]
        %v2001 = vld [vmem:[%s1993 + $0x38] sm:$0xff]
        %v2002 = vld [vmem:[%s1993 + $0x40] sm:$0xff]
        %v2003 = vld [vmem:[%s1993 + $0x48] sm:$0xff]
        %v2004 = vld [vmem:[%s1993 + $0x50] sm:$0xff]
        %v2005 = vld [vmem:[%s1993 + $0x58] sm:$0xff]
        %v2006 = vld [vmem:[%s1993 + $0x60] sm:$0xff]
        %v2007 = vld [vmem:[%s1993 + $0x68] sm:$0xff]
        %v2008 = vld [vmem:[%s1993 + $0x70] sm:$0xff]
        %v2009 = vld [vmem:[%s1993 + $0x78] sm:$0xff]
        %2010 = vmatprep.subr.mxu0 %v1995
        %2011 = vmatpush1.msra.mxu0 %v1994
        %2012 = vmatprep.subr.mxu0 %v1997
        %2013 = vmatpush1.msra.mxu0 %v1996
        %2014 = vmatprep.subr.mxu0 %v1999
        %2015 = vmatpush1.msra.mxu0 %v1998
        %2016 = vmatprep.subr.mxu0 %v2001
        %2017 = vmatpush1.msra.mxu0 %v2000
        %2018 = vmatprep.subr.mxu0 %v2003
        %2019 = vmatpush1.msra.mxu0 %v2002
        %2020 = vmatprep.subr.mxu0 %v2005
        %2021 = vmatpush1.msra.mxu0 %v2004
        %2022 = vmatprep.subr.mxu0 %v2007
        %2023 = vmatpush1.msra.mxu0 %v2006
        %2024 = vmatprep.subr.mxu0 %v2009
        %2025 = vmatpush1.msra.mxu0 %v2008
        %2026 = vmatprep.subr.mxu0 0.0
        %2027 = vmatpush1.msra.mxu0 0.0
        %2028 = vmatprep.subr.mxu0 0.0
        %2029 = vmatpush1.msra.mxu0 0.0
        %2030 = vmatprep.subr.mxu0 0.0
        %2031 = vmatpush1.msra.mxu0 0.0
        %2032 = vmatprep.subr.mxu0 0.0
        %2033 = vmatpush1.msra.mxu0 0.0
        %2034 = vmatprep.subr.mxu0 0.0
        %2035 = vmatpush1.msra.mxu0 0.0
        %2036 = vmatprep.subr.mxu0 0.0
        %2037 = vmatpush1.msra.mxu0 0.0
        %2038 = vmatprep.subr.mxu0 0.0
        %2039 = vmatpush1.msra.mxu0 0.0
        %2040 = vmatprep.subr.mxu0 0.0
        %2041 = vmatpush1.msra.mxu0 0.0
        %2042 = vmatprep.subr.mxu0 0.0
        %2043 = vmatpush1.msra.mxu0 0.0
        %2044 = vmatprep.subr.mxu0 0.0
        %2045 = vmatpush1.msra.mxu0 0.0
        %2046 = vmatprep.subr.mxu0 0.0
        %2047 = vmatpush1.msra.mxu0 0.0
        %2048 = vmatprep.subr.mxu0 0.0
        %2049 = vmatpush1.msra.mxu0 0.0
        %2050 = vmatprep.subr.mxu0 0.0
        %2051 = vmatpush1.msra.mxu0 0.0
        %2052 = vmatprep.subr.mxu0 0.0
        %2053 = vmatpush1.msra.mxu0 0.0
        %2054 = vmatprep.subr.mxu0 0.0
        %2055 = vmatpush1.msra.mxu0 0.0
        %2056 = vmatprep.subr.mxu0 0.0
        %2057 = vmatpush1.msra.mxu0 0.0
        %2058 = vmatprep.subr.mxu0 0.0
        %2059 = vmatpush1.msra.mxu0 0.0
        %2060 = vmatprep.subr.mxu0 0.0
        %2061 = vmatpush1.msra.mxu0 0.0
        %2062 = vmatprep.subr.mxu0 0.0
        %2063 = vmatpush1.msra.mxu0 0.0
        %2064 = vmatprep.subr.mxu0 0.0
        %2065 = vmatpush1.msra.mxu0 0.0
        %2066 = vmatprep.subr.mxu0 0.0
        %2067 = vmatpush1.msra.mxu0 0.0
        %2068 = vmatprep.subr.mxu0 0.0
        %2069 = vmatpush1.msra.mxu0 0.0
        %2070 = vmatprep.subr.mxu0 0.0
        %2071 = vmatpush1.msra.mxu0 0.0
        %2072 = vmatprep.subr.mxu0 0.0
        %2073 = vmatpush1.msra.mxu0 0.0
        %2074 = vmatprep.mubr.f32.mxu0 0.0
        %2075 = vmatmul.mubr.f32.gmra.mrb[0].mxu0 %v512
        %v2076 = vpop.f32.mrb[0].mxu0
        %v2077 = vadd.f32 0.0, %v2076
        %v2078 = vpop.f32.mrb[0].mxu0
        %v2079 = vadd.f32 0.0, %v2078
        %2080 = vmatprep.mubr.f32.mxu0 0.0
        %2081 = vmatmul.mubr.f32.gmra.mrb[0].mxu0 %v515
        %v2082 = vpop.f32.mrb[0].mxu0
        %v2083 = vadd.f32 0.0, %v2082
        %v2084 = vpop.f32.mrb[0].mxu0
        %v2085 = vadd.f32 0.0, %v2084
        %2086 = vdwg.mxu0
        %v2087 = vmul.f32 %v2077, %v271
        %v2088 = vmul.f32 %v2079, %v272
        %v2089 = vmul.f32 %v2083, %v273
        %v2090 = vmul.f32 %v2085, %v274
        %v2091 = vld [vmem:[%s5] sm:$0xff]
        %v2092 = vld [vmem:[%s5 + $0x8] sm:$0xff]
        %v2093 = vld [vmem:[%s5 + $0x10] sm:$0xff]
        %v2094 = vld [vmem:[%s5 + $0x18] sm:$0xff]
        %v2095 = vld [vmem:[%s5 + $0x20] sm:$0xff]
        %v2096 = vld [vmem:[%s5 + $0x28] sm:$0xff]
        %v2097 = vld [vmem:[%s5 + $0x30] sm:$0xff]
        %v2098 = vld [vmem:[%s5 + $0x38] sm:$0xff]
        %v2099 = vld [vmem:[%s5 + $0x40] sm:$0xff]
        %v2100 = vld [vmem:[%s5 + $0x48] sm:$0xff]
        %v2101 = vld [vmem:[%s5 + $0x50] sm:$0xff]
        %v2102 = vld [vmem:[%s5 + $0x58] sm:$0xff]
        %v2103 = vld [vmem:[%s5 + $0x60] sm:$0xff]
        %v2104 = vld [vmem:[%s5 + $0x68] sm:$0xff]
        %v2105 = vld [vmem:[%s5 + $0x70] sm:$0xff]
        %v2106 = vld [vmem:[%s5 + $0x78] sm:$0xff]
        %v2107 = vld [vmem:[%s5 + $0x80] sm:$0xff]
        %v2108 = vld [vmem:[%s5 + $0x88] sm:$0xff]
        %v2109 = vld [vmem:[%s5 + $0x90] sm:$0xff]
        %v2110 = vld [vmem:[%s5 + $0x98] sm:$0xff]
        %v2111 = vld [vmem:[%s5 + $0xa0] sm:$0xff]
        %v2112 = vld [vmem:[%s5 + $0xa8] sm:$0xff]
        %v2113 = vld [vmem:[%s5 + $0xb0] sm:$0xff]
        %v2114 = vld [vmem:[%s5 + $0xb8] sm:$0xff]
        %v2115 = vld [vmem:[%s5 + $0xc0] sm:$0xff]
        %v2116 = vld [vmem:[%s5 + $0xc8] sm:$0xff]
        %v2117 = vld [vmem:[%s5 + $0xd0] sm:$0xff]
        %v2118 = vld [vmem:[%s5 + $0xd8] sm:$0xff]
        %v2119 = vld [vmem:[%s5 + $0xe0] sm:$0xff]
        %v2120 = vld [vmem:[%s5 + $0xe8] sm:$0xff]
        %v2121 = vld [vmem:[%s5 + $0xf0] sm:$0xff]
        %v2122 = vld [vmem:[%s5 + $0xf8] sm:$0xff]
        %2123 = vmatprep.subr.mxu0 0.0
        %2124 = vmatpush1.msra.mxu0 %v2091
        %2125 = vmatprep.subr.mxu0 0.0
        %2126 = vmatpush1.msra.mxu0 %v2092
        %2127 = vmatprep.subr.mxu0 0.0
        %2128 = vmatpush1.msra.mxu0 %v2093
        %2129 = vmatprep.subr.mxu0 0.0
        %2130 = vmatpush1.msra.mxu0 %v2094
        %2131 = vmatprep.subr.mxu0 0.0
        %2132 = vmatpush1.msra.mxu0 %v2095
        %2133 = vmatprep.subr.mxu0 0.0
        %2134 = vmatpush1.msra.mxu0 %v2096
        %2135 = vmatprep.subr.mxu0 0.0
        %2136 = vmatpush1.msra.mxu0 %v2097
        %2137 = vmatprep.subr.mxu0 0.0
        %2138 = vmatpush1.msra.mxu0 %v2098
        %2139 = vmatprep.subr.mxu0 0.0
        %2140 = vmatpush1.msra.mxu0 %v2099
        %2141 = vmatprep.subr.mxu0 0.0
        %2142 = vmatpush1.msra.mxu0 %v2100
        %2143 = vmatprep.subr.mxu0 0.0
        %2144 = vmatpush1.msra.mxu0 %v2101
        %2145 = vmatprep.subr.mxu0 0.0
        %2146 = vmatpush1.msra.mxu0 %v2102
        %2147 = vmatprep.subr.mxu0 0.0
        %2148 = vmatpush1.msra.mxu0 %v2103
        %2149 = vmatprep.subr.mxu0 0.0
        %2150 = vmatpush1.msra.mxu0 %v2104
        %2151 = vmatprep.subr.mxu0 0.0
        %2152 = vmatpush1.msra.mxu0 %v2105
        %2153 = vmatprep.subr.mxu0 0.0
        %2154 = vmatpush1.msra.mxu0 %v2106
        %2155 = vmatprep.subr.mxu0 0.0
        %2156 = vmatpush1.msra.mxu0 %v2107
        %2157 = vmatprep.subr.mxu0 0.0
        %2158 = vmatpush1.msra.mxu0 %v2108
        %2159 = vmatprep.subr.mxu0 0.0
        %2160 = vmatpush1.msra.mxu0 %v2109
        %2161 = vmatprep.subr.mxu0 0.0
        %2162 = vmatpush1.msra.mxu0 %v2110
        %2163 = vmatprep.subr.mxu0 0.0
        %2164 = vmatpush1.msra.mxu0 %v2111
        %2165 = vmatprep.subr.mxu0 0.0
        %2166 = vmatpush1.msra.mxu0 %v2112
        %2167 = vmatprep.subr.mxu0 0.0
        %2168 = vmatpush1.msra.mxu0 %v2113
        %2169 = vmatprep.subr.mxu0 0.0
        %2170 = vmatpush1.msra.mxu0 %v2114
        %2171 = vmatprep.subr.mxu0 0.0
        %2172 = vmatpush1.msra.mxu0 %v2115
        %2173 = vmatprep.subr.mxu0 0.0
        %2174 = vmatpush1.msra.mxu0 %v2116
        %2175 = vmatprep.subr.mxu0 0.0
        %2176 = vmatpush1.msra.mxu0 %v2117
        %2177 = vmatprep.subr.mxu0 0.0
        %2178 = vmatpush1.msra.mxu0 %v2118
        %2179 = vmatprep.subr.mxu0 0.0
        %2180 = vmatpush1.msra.mxu0 %v2119
        %2181 = vmatprep.subr.mxu0 0.0
        %2182 = vmatpush1.msra.mxu0 %v2120
        %2183 = vmatprep.subr.mxu0 0.0
        %2184 = vmatpush1.msra.mxu0 %v2121
        %2185 = vmatprep.subr.mxu0 0.0
        %2186 = vmatpush1.msra.mxu0 %v2122
        %2187 = vmatprep.mubr.f32.mxu0 %v2088
        %2188 = vmatmul.mubr.f32.gmra.mrb[0].mxu0 %v2087
        %v2189 = vpop.f32.mrb[0].mxu0
        %v2190 = vadd.f32 0.0, %v2189
        %v2191 = vpop.f32.mrb[0].mxu0
        %2192 = vmatprep.mubr.f32.mxu0 %v2090
        %2193 = vmatmul.mubr.f32.gmra.mrb[0].mxu0 %v2089
        %v2194 = vpop.f32.mrb[0].mxu0
        %v2195 = vadd.f32 0.0, %v2194
        %v2196 = vpop.f32.mrb[0].mxu0
        %2197 = vdwg.mxu0
        %2200 = vrot.lane.b32.xlu0 %v2190, 96
        %v2201 = vpop.permute.xlu0 %2200
        %2202 = vrot.lane.b32.xlu0 %v2195, 96
        %v2203 = vpop.permute.xlu0 %2202
        %2206 = vst.msk [vmem:[%s262 + $0x8] sm:$0xff] %vm1353, %v2201
        %2207 = vst.msk [vmem:[%s262 + $0x18] sm:$0xff] %vm1353, %v2203
        %s2208 = sand.u32 %s160, 1
        %s2209 = scalar_lea.sflag [#allocation4], %s2208
        %s2210 = sand.u32 %s160, 1
        %s2211 = smul.addr %s2210, 32
        %s2212 = scalar_lea.vmem [#allocation5], %s2211
        // Predicated region
        $region49: #{tpu_custom_call.1} parent=43 // pred_check
          %p2213 = pneg %p170
        $region50: #{tpu_custom_call.1} parent=43 // pred_check_branch
          %2215 = sbr.rel (%p2213) target = $region52
        $region51: #{tpu_custom_call.1} parent=43 // pred_region
          %s2216 = smul.u32 2, %s21
          %s2218 = ssub.s32 512, 512
          %2219 = vsyncadd %s2209, %s2218
          %s2220 = smul.addr %s2216, 2
          %s2221 = smul.addr %s2220, 128
          %s2222 = scalar_lea.hbm %s6, %s2221
          %s2223 = sshll.u32 %s2212, 4
          %s2224 = int_to_ptr.vmem [resolvable:$true] %s2223
          %2229 = dma.vmem_to_hbm [thread:$0]  %s2224, 512, %s2222, %s2209, 256, 256, 16
        $region52: #{tpu_custom_call.1} parent=43 // pred_fallthru
          _
      $region44: #{tpu_custom_call.1} parent=5 // pred_fallthru
        _
      %p2230 = scmp.le.s32.totalorder 2, %s16
      // Predicated region
      $region53: #{tpu_custom_call.1} parent=5 // pred_check
        %p2231 = pneg %p2230
      $region54: #{tpu_custom_call.1} parent=5 // pred_check_branch
        %2233 = sbr.rel (%p2231) target = $region56
      $region55: #{tpu_custom_call.1} parent=5 // pred_region
        %s2234 = ssub.s32 %s16, 2
        // Predicated region
        $region57: #{tpu_custom_call.1} parent=55 // pred_check
          %p2235 = pneg %p176
        $region58: #{tpu_custom_call.1} parent=55 // pred_check_branch
          %2237 = sbr.rel (%p2235) target = $region60
        $region59: #{tpu_custom_call.1} parent=55 // pred_region
          %s2238 = sand.u32 %s161, 1
          %s2239 = scalar_lea.sflag [#allocation4], %s2238
          %s2240 = sand.u32 %s161, 1
          %s2241 = smul.addr %s2240, 32
          %s2242 = scalar_lea.vmem [#allocation5], %s2241
          %2243 = dma.done %s2239, 512
        $region60: #{tpu_custom_call.1} parent=55 // pred_fallthru
          _
      $region56: #{tpu_custom_call.1} parent=5 // pred_fallthru
        _
    $region6: #{tpu_custom_call.1} parent=1 // loop_footer
      %s20 = sadd.s32 1, %s16
    $region7: #{tpu_custom_call.1} parent=1 // loop_footer_branch
      %15 = sbr.rel target = $region3
    $region8: #{tpu_custom_call.1} parent=1 // loop_exit
      _
    %2244 = vsyncpa [#allocation3], 1
    %s2245 = scalar_lea.sflag [#allocation3], 1
    %2246 = vsyncpa %s2245, 1
    %2247 = vsyncpa [#allocation4], 1
    %s2248 = scalar_lea.sflag [#allocation4], 1
    %2249 = vsyncpa %s2248, 1

</llo_original>
